<compile_context>
chip_gen: v5e
topology: v5e:2x2
jax: 0.10.0
libtpu: 0.0.40
codegen_flags: <defaults>
</compile_context>

<pallas_src>
import jax
import jax.numpy as jnp
from jax.experimental import pallas as pl
from jax.experimental.pallas import tpu as pltpu


def _round_up(n, m):
    return ((n + m - 1) // m) * m


# ---------------------------------------------------------------------------
# Kernel: whole fused forward pass for one batch tile.
# ---------------------------------------------------------------------------
def decoder_kernel(x_ref,
                   w1_ref, b1_ref,
                   w2_ref, b2_ref,
                   w3_ref, b3_ref,
                   w4_ref, b4_ref,
                   o_ref):
    """Weights are [in_pad, out_pad] (y = x @ W + b); biases are f32 [1, out_pad].

    Layer 4 is the algebraic fusion of the original layers 4 and 5 (there is
    no activation between them).  Accumulation is always f32; `dt` is the MXU
    feed dtype (bf16 or f32).  Epilogue is exactly bias-add + ReLU + downcast.
    """
    dt = w1_ref.dtype
    h = x_ref[...]
    h = jnp.maximum(
        jnp.dot(h, w1_ref[...], preferred_element_type=jnp.float32) + b1_ref[...],
        0.0).astype(dt)
    h = jnp.maximum(
        jnp.dot(h, w2_ref[...], preferred_element_type=jnp.float32) + b2_ref[...],
        0.0).astype(dt)
    h = jnp.maximum(
        jnp.dot(h, w3_ref[...], preferred_element_type=jnp.float32) + b3_ref[...],
        0.0).astype(dt)
    # Fused final Linear pair (no activation between them).
    h = jnp.dot(h, w4_ref[...], preferred_element_type=jnp.float32) + b4_ref[...]
    o_ref[...] = h.astype(o_ref.dtype)


# ---------------------------------------------------------------------------
# One-time weight prep (call at init, NOT per forward step).
# ---------------------------------------------------------------------------
def prepare_decoder_params(params, compute_dtype=jnp.bfloat16):
    """Fuse, pad and cast the weights once.

    * Fuses the last two Linears: (h @ W4 + b4) @ W5 + b5 == h @ (W4@W5) + (b4@W5 + b5).
    * Zero-pads every feature dim (including z_dim) to a multiple of 128 so all
      loads / MXU feeds are lane-dense and unmasked.  Padding is exact:
      ReLU(0)=0 and zero weight rows/cols propagate zeros.
    * Casts weights to `compute_dtype` (bf16 default: MXU-native on v5e/v6e/v7x;
      f32 matmuls lower to multi-pass emulation).  Biases stay f32 and are
      added on the f32 accumulator.

    params: list of 5 (W[in,out] f32, b[1,out] f32).
    Returns a dict consumed by decoder_v1_forward.
    """
    (w1, b1), (w2, b2), (w3, b3), (w4, b4), (w5, b5) = params
    z_dim = w1.shape[0]
    d_in = w5.shape[1]

    # NOTE: fusing then casting to bf16 rounds slightly differently than
    # running the two Linears separately in bf16 (fine for this tolerance).
    w45 = jnp.dot(w4, w5, preferred_element_type=jnp.float32)
    b45 = jnp.dot(b4, w5, preferred_element_type=jnp.float32) + b5
    fused = [(w1, b1), (w2, b2), (w3, b3), (w45, b45)]

    weights = []
    prev_pad = _round_up(z_dim, 128)
    z_pad = prev_pad
    for w, b in fused:
        fin, fout = w.shape
        fout_p = _round_up(fout, 128)
        wp = jnp.zeros((prev_pad, fout_p), jnp.float32).at[:fin, :fout].set(w)
        bp = jnp.zeros((1, fout_p), jnp.float32).at[:, :fout].set(b)
        weights.append((wp.astype(compute_dtype), bp))  # biases stay f32
        prev_pad = fout_p

    return {
        "weights": tuple(weights),
        "z_dim": z_dim,
        "z_pad": z_pad,
        "d_in": d_in,
        "d_pad": prev_pad,
    }


# ---------------------------------------------------------------------------
# Forward wrapper.
# ---------------------------------------------------------------------------
def decoder_v1_forward(x, prepped, *, tile_m=1024, keep_padded_features=False,
                       vmem_budget_bytes=40 * 1024 * 1024):
    """x: [B, z_dim] f32.  prepped: output of prepare_decoder_params().

    Returns [B, D_in] f32.  If keep_padded_features=True, returns the padded
    [B, D_pad] slab instead (skips an extra full HBM read+write of the output
    when D_in is not a multiple of 128 -- slice lazily in the consumer).
    """
    B, z_dim = x.shape
    assert z_dim == prepped["z_dim"], "x feature dim does not match params"
    weights = prepped["weights"]
    z_pad, d_in, d_pad = prepped["z_pad"], prepped["d_in"], prepped["d_pad"]
    cdt = weights[0][0].dtype
    itemsize = cdt.itemsize

    # bf16 tiles want 16-row alignment (sublane packing); f32 wants 8.
    align = 16 if itemsize < 4 else 8

    # Size the batch grid to have >=2 steps whenever B allows it so both v7x
    # TensorCores get work under dimension_semantics=("parallel",); cap at the
    # requested tile_m for large batches.
    tile_m = max(align, min(_round_up(tile_m, align),
                            _round_up(pl.cdiv(B, 2), align)))

    # --- VMEM budget guard ----------------------------------------------
    # Weights/biases are single-buffered (Buffered(1)); x and out tiles are
    # double-buffered; plus live activations of the widest layer.
    weight_bytes = sum(w.size * w.dtype.itemsize + b.size * b.dtype.itemsize
                       for w, b in weights)
    max_width = max(w.shape[1] for w, _ in weights)

    def vmem_estimate(tm):
        return (2 * tm * z_pad * itemsize           # x tile (double-buffered)
                + 2 * tm * d_pad * 4                # f32 out tile (double-buffered)
                + weight_bytes                      # weights/biases, 1 buffer
                + tm * max_width * (4 + itemsize))  # live activations

    while tile_m > align and vmem_estimate(tile_m) > vmem_budget_bytes:
        tile_m = max(align, _round_up(tile_m // 2, align))
    # TODO(synk): for very large D_in, add a second grid axis over d_pad for
    # the fused final layer instead of only shrinking tile_m.

    B_pad = _round_up(B, tile_m)
    grid = (B_pad // tile_m,)

    # Single pad/cast of x: batch rows up to B_pad and z columns up to z_pad
    # (lane-dense layer-1 loads / MXU feed).  Padded rows are discarded below;
    # padded columns stay exactly zero through every layer.
    if B_pad == B and z_pad == z_dim:
        x_p = x.astype(cdt)
    else:
        x_p = jnp.zeros((B_pad, z_pad), cdt).at[:B, :z_dim].set(x.astype(cdt))

    flat_params = []
    for w, b in weights:
        flat_params.extend([w, b])

    def batch_spec(feat):
        return pl.BlockSpec((tile_m, feat), lambda i: (i, 0))

    def build_in_specs(single_buffer_weights):
        def weight_spec(shape):
            idx_map = lambda i: (0,) * len(shape)  # noqa: E731  (constant: VMEM-resident)
            if single_buffer_weights:
                # Constant index map never re-DMAs, so the second pipeline
                # buffer is pure VMEM waste -> single buffer.
                return pl.BlockSpec(shape, idx_map, pipeline_mode=pl.Buffered(1))
            return pl.BlockSpec(shape, idx_map)

        specs = [batch_spec(z_pad)]
        for w, b in weights:
            specs.append(weight_spec(w.shape))
            specs.append(weight_spec(b.shape))
        return specs

    flops = 2 * B_pad * sum(w.shape[0] * w.shape[1] for w, _ in weights)
    bytes_accessed = (x_p.size * x_p.dtype.itemsize + weight_bytes
                      + B_pad * d_pad * 4)
    vmem_limit = max(32 << 20,
                     min(int(vmem_estimate(tile_m) * 1.25) + (4 << 20), 100 << 20))

    def run(single_buffer_weights):
        return pl.pallas_call(
            decoder_kernel,
            out_shape=jax.ShapeDtypeStruct((B_pad, d_pad), jnp.float32),
            grid_spec=pltpu.PrefetchScalarGridSpec(
                num_scalar_prefetch=0,
                grid=grid,
                in_specs=build_in_specs(single_buffer_weights),
                out_specs=batch_spec(d_pad),
            ),
            compiler_params=pltpu.CompilerParams(
                dimension_semantics=("parallel",),
                vmem_limit_bytes=vmem_limit),
            cost_estimate=pl.CostEstimate(
                flops=flops, transcendentals=0, bytes_accessed=bytes_accessed),
        )(x_p, *flat_params)

    try:
        out = run(single_buffer_weights=True)
    except Exception:
        # Portability fallback for jax versions where Buffered(1) is not
        # accepted on top-level pallas_call BlockSpecs (identical semantics,
        # just double-buffered weights).
        out = run(single_buffer_weights=False)

    if B_pad != B:
        out = out[:B]
    if (not keep_padded_features) and d_pad != d_in:
        # NOTE: narrowing the lane dim costs an extra full read+write of the
        # output; prefer keep_padded_features=True and slice in the consumer.
        out = out[:, :d_in]
    return out


# ---------------------------------------------------------------------------
# Reference + init helpers.
# ---------------------------------------------------------------------------
def init_params(key, z_dim, D_in):
    """PyTorch nn.Linear-style init (U(-k,k), k=1/sqrt(fan_in)); W is [in,out]."""
    layer_dims = [(z_dim, 70), (70, 150), (150, 300), (300, D_in), (D_in, D_in)]
    params = []
    for fan_in, fan_out in layer_dims:
        key, kw, kb = jax.random.split(key, 3)
        bound = 1.0 / jnp.sqrt(jnp.float32(fan_in))
        w = jax.random.uniform(kw, (fan_in, fan_out), jnp.float32, -bound, bound)
        b = jax.random.uniform(kb, (1, fan_out), jnp.float32, -bound, bound)
        params.append((w, b))
    return params


def decoder_ref(x, params):
    """Pure-JAX reference of the ORIGINAL (unfused, unpadded) module."""
    h = x
    for i, (w, b) in enumerate(params):
        h = h @ w + b
        if i < 3:  # ReLU after the first 3 layers only
            h = jnp.maximum(h, 0.0)
    return h


if __name__ == "__main__":
    z_dim, D_in, batch = 16, 128, 64

    key = jax.random.PRNGKey(0)
    key, kx = jax.random.split(key)
    x = jax.random.normal(kx, (batch, z_dim), jnp.float32)
    params = init_params(key, z_dim, D_in)

    ref = decoder_ref(x, params)

    # One-time weight prep (fuse + pad + cast), hoisted out of the step path.
    prepped_bf16 = prepare_decoder_params(params)                       # bf16 default
    prepped_f32 = prepare_decoder_params(params, compute_dtype=jnp.float32)

    # f32 path: exact-ish vs reference.
    out_f32 = jax.block_until_ready(decoder_v1_forward(x, prepped_f32))
    assert out_f32.shape == (batch, D_in)
    assert jnp.allclose(out_f32, ref, atol=2e-4, rtol=1e-4), "f32 mismatch vs reference"

    # Non-multiple batch exercises the padded-tail path (grid still has 2 steps).
    out_tail = jax.block_until_ready(decoder_v1_forward(x[:50], prepped_f32))
    assert out_tail.shape == (50, D_in)
    assert jnp.allclose(out_tail, ref[:50], atol=2e-4, rtol=1e-4), "tail mismatch"

    # Default bf16 path (MXU-native on v5e/v6e/v7x); f32 accumulation.
    out_bf16 = jax.block_until_ready(decoder_v1_forward(x, prepped_bf16))
    assert out_bf16.shape == (batch, D_in)
    rel_err = jnp.max(jnp.abs(out_bf16 - ref)) / (jnp.max(jnp.abs(ref)) + 1e-6)
    assert rel_err < 5e-2, f"bf16 mismatch vs reference (rel_err={rel_err})"

    print("KERNEL_OK")
</pallas_src>

<mosaic_0001>
module attributes {stable_mosaic.version = 11 : i64} {
  func.func @decoder_kernel(%arg0: i32, %arg1: memref<32x128xf32, #tpu.memory_space<vmem>>, %arg2: memref<128x128xf32, #tpu.memory_space<vmem>>, %arg3: memref<1x128xf32, #tpu.memory_space<vmem>>, %arg4: memref<128x256xf32, #tpu.memory_space<vmem>>, %arg5: memref<1x256xf32, #tpu.memory_space<vmem>>, %arg6: memref<256x384xf32, #tpu.memory_space<vmem>>, %arg7: memref<1x384xf32, #tpu.memory_space<vmem>>, %arg8: memref<384x128xf32, #tpu.memory_space<vmem>>, %arg9: memref<1x128xf32, #tpu.memory_space<vmem>>, %arg10: memref<32x128xf32, #tpu.memory_space<vmem>>) attributes {dimension_semantics = [#tpu.dimension_semantics<parallel>], iteration_bounds = array<i64: 2>, scalar_prefetch = 0 : i64, scratch_operands = 0 : i64, tpu.core_type = #tpu.core_type<tc>, window_params = [{transform_indices = @transform_0, window_bounds = array<i64: 32, 128>}, {pipeline_mode = #tpu.pipeline_mode<synchronous>, transform_indices = @transform_1, window_bounds = array<i64: 128, 128>}, {pipeline_mode = #tpu.pipeline_mode<synchronous>, transform_indices = @transform_2, window_bounds = array<i64: 1, 128>}, {pipeline_mode = #tpu.pipeline_mode<synchronous>, transform_indices = @transform_3, window_bounds = array<i64: 128, 256>}, {pipeline_mode = #tpu.pipeline_mode<synchronous>, transform_indices = @transform_4, window_bounds = array<i64: 1, 256>}, {pipeline_mode = #tpu.pipeline_mode<synchronous>, transform_indices = @transform_5, window_bounds = array<i64: 256, 384>}, {pipeline_mode = #tpu.pipeline_mode<synchronous>, transform_indices = @transform_6, window_bounds = array<i64: 1, 384>}, {pipeline_mode = #tpu.pipeline_mode<synchronous>, transform_indices = @transform_7, window_bounds = array<i64: 384, 128>}, {pipeline_mode = #tpu.pipeline_mode<synchronous>, transform_indices = @transform_8, window_bounds = array<i64: 1, 128>}, {transform_indices = @transform_9, window_bounds = array<i64: 32, 128>}]} {
    %c0 = arith.constant 0 : index
    %c0_0 = arith.constant 0 : index
    %0 = vector.load %arg1[%c0, %c0_0] : memref<32x128xf32, #tpu.memory_space<vmem>>, vector<32x128xf32>
    %c0_1 = arith.constant 0 : index
    %c0_2 = arith.constant 0 : index
    %1 = vector.load %arg2[%c0_1, %c0_2] : memref<128x128xf32, #tpu.memory_space<vmem>>, vector<128x128xf32>
    %cst = arith.constant dense<0.000000e+00> : vector<32x128xf32>
    %2 = tpu.matmul %0, %1, %cst {dimension_numbers = #tpu.dot_dimension_numbers<[1], [0], [0], [1], [0, 0, 1, 1], [], []>} : vector<32x128xf32>, vector<128x128xf32>, vector<32x128xf32> -> vector<32x128xf32>
    %c0_3 = arith.constant 0 : index
    %c0_4 = arith.constant 0 : index
    %3 = vector.load %arg3[%c0_3, %c0_4] : memref<1x128xf32, #tpu.memory_space<vmem>>, vector<1x128xf32>
    %4 = vector.broadcast %3 : vector<1x128xf32> to vector<32x128xf32>
    %5 = arith.addf %2, %4 : vector<32x128xf32>
    %cst_5 = arith.constant 0.000000e+00 : f32
    %6 = vector.broadcast %cst_5 : f32 to vector<32x128xf32>
    %7 = arith.maximumf %5, %6 : vector<32x128xf32>
    %c0_6 = arith.constant 0 : index
    %c0_7 = arith.constant 0 : index
    %8 = vector.load %arg4[%c0_6, %c0_7] : memref<128x256xf32, #tpu.memory_space<vmem>>, vector<128x256xf32>
    %cst_8 = arith.constant dense<0.000000e+00> : vector<32x256xf32>
    %9 = tpu.matmul %7, %8, %cst_8 {dimension_numbers = #tpu.dot_dimension_numbers<[1], [0], [0], [1], [0, 0, 1, 1], [], []>} : vector<32x128xf32>, vector<128x256xf32>, vector<32x256xf32> -> vector<32x256xf32>
    %c0_9 = arith.constant 0 : index
    %c0_10 = arith.constant 0 : index
    %10 = vector.load %arg5[%c0_9, %c0_10] : memref<1x256xf32, #tpu.memory_space<vmem>>, vector<1x256xf32>
    %11 = vector.broadcast %10 : vector<1x256xf32> to vector<32x256xf32>
    %12 = arith.addf %9, %11 : vector<32x256xf32>
    %cst_11 = arith.constant 0.000000e+00 : f32
    %13 = vector.broadcast %cst_11 : f32 to vector<32x256xf32>
    %14 = arith.maximumf %12, %13 : vector<32x256xf32>
    %c0_12 = arith.constant 0 : index
    %c0_13 = arith.constant 0 : index
    %15 = vector.load %arg6[%c0_12, %c0_13] : memref<256x384xf32, #tpu.memory_space<vmem>>, vector<256x384xf32>
    %cst_14 = arith.constant dense<0.000000e+00> : vector<32x384xf32>
    %16 = tpu.matmul %14, %15, %cst_14 {dimension_numbers = #tpu.dot_dimension_numbers<[1], [0], [0], [1], [0, 0, 1, 1], [], []>} : vector<32x256xf32>, vector<256x384xf32>, vector<32x384xf32> -> vector<32x384xf32>
    %c0_15 = arith.constant 0 : index
    %c0_16 = arith.constant 0 : index
    %17 = vector.load %arg7[%c0_15, %c0_16] : memref<1x384xf32, #tpu.memory_space<vmem>>, vector<1x384xf32>
    %18 = vector.broadcast %17 : vector<1x384xf32> to vector<32x384xf32>
    %19 = arith.addf %16, %18 : vector<32x384xf32>
    %cst_17 = arith.constant 0.000000e+00 : f32
    %20 = vector.broadcast %cst_17 : f32 to vector<32x384xf32>
    %21 = arith.maximumf %19, %20 : vector<32x384xf32>
    %c0_18 = arith.constant 0 : index
    %c0_19 = arith.constant 0 : index
    %22 = vector.load %arg8[%c0_18, %c0_19] : memref<384x128xf32, #tpu.memory_space<vmem>>, vector<384x128xf32>
    %cst_20 = arith.constant dense<0.000000e+00> : vector<32x128xf32>
    %23 = tpu.matmul %21, %22, %cst_20 {dimension_numbers = #tpu.dot_dimension_numbers<[1], [0], [0], [1], [0, 0, 1, 1], [], []>} : vector<32x384xf32>, vector<384x128xf32>, vector<32x128xf32> -> vector<32x128xf32>
    %c0_21 = arith.constant 0 : index
    %c0_22 = arith.constant 0 : index
    %24 = vector.load %arg9[%c0_21, %c0_22] : memref<1x128xf32, #tpu.memory_space<vmem>>, vector<1x128xf32>
    %25 = vector.broadcast %24 : vector<1x128xf32> to vector<32x128xf32>
    %26 = arith.addf %23, %25 : vector<32x128xf32>
    %c0_23 = arith.constant 0 : index
    %c0_24 = arith.constant 0 : index
    %27 = vector.load %arg10[%c0_23, %c0_24] : memref<32x128xf32, #tpu.memory_space<vmem>>, vector<32x128xf32>
    tpu.vector_store %arg10[%c0_23, %c0_24], %26 {strides = array<i32>} : memref<32x128xf32, #tpu.memory_space<vmem>>, vector<32x128xf32>,
    return
  }
  func.func @transform_0(%arg0: i32) -> (i32, i32) {
    %c0_i32 = arith.constant 0 : i32
    %c0_i32_0 = arith.constant 0 : i32
    return %arg0, %c0_i32 : i32, i32
  }
  func.func @transform_1(%arg0: i32) -> (i32, i32) {
    %c0_i32 = arith.constant 0 : i32
    %c0_i32_0 = arith.constant 0 : i32
    %c0_i32_1 = arith.constant 0 : i32
    return %c0_i32, %c0_i32_0 : i32, i32
  }
  func.func @transform_2(%arg0: i32) -> (i32, i32) {
    %c0_i32 = arith.constant 0 : i32
    %c0_i32_0 = arith.constant 0 : i32
    %c0_i32_1 = arith.constant 0 : i32
    return %c0_i32, %c0_i32_0 : i32, i32
  }
  func.func @transform_3(%arg0: i32) -> (i32, i32) {
    %c0_i32 = arith.constant 0 : i32
    %c0_i32_0 = arith.constant 0 : i32
    %c0_i32_1 = arith.constant 0 : i32
    return %c0_i32, %c0_i32_0 : i32, i32
  }
  func.func @transform_4(%arg0: i32) -> (i32, i32) {
    %c0_i32 = arith.constant 0 : i32
    %c0_i32_0 = arith.constant 0 : i32
    %c0_i32_1 = arith.constant 0 : i32
    return %c0_i32, %c0_i32_0 : i32, i32
  }
  func.func @transform_5(%arg0: i32) -> (i32, i32) {
    %c0_i32 = arith.constant 0 : i32
    %c0_i32_0 = arith.constant 0 : i32
    %c0_i32_1 = arith.constant 0 : i32
    return %c0_i32, %c0_i32_0 : i32, i32
  }
  func.func @transform_6(%arg0: i32) -> (i32, i32) {
    %c0_i32 = arith.constant 0 : i32
    %c0_i32_0 = arith.constant 0 : i32
    %c0_i32_1 = arith.constant 0 : i32
    return %c0_i32, %c0_i32_0 : i32, i32
  }
  func.func @transform_7(%arg0: i32) -> (i32, i32) {
    %c0_i32 = arith.constant 0 : i32
    %c0_i32_0 = arith.constant 0 : i32
    %c0_i32_1 = arith.constant 0 : i32
    return %c0_i32, %c0_i32_0 : i32, i32
  }
  func.func @transform_8(%arg0: i32) -> (i32, i32) {
    %c0_i32 = arith.constant 0 : i32
    %c0_i32_0 = arith.constant 0 : i32
    %c0_i32_1 = arith.constant 0 : i32
    return %c0_i32, %c0_i32_0 : i32, i32
  }
  func.func @transform_9(%arg0: i32) -> (i32, i32) {
    %c0_i32 = arith.constant 0 : i32
    %c0_i32_0 = arith.constant 0 : i32
    return %arg0, %c0_i32 : i32, i32
  }
}

module attributes {stable_mosaic.version = 11 : i64} {
  func.func @decoder_kernel(%arg0: i32, %arg1: memref<32x128xf32, #tpu.memory_space<vmem>>, %arg2: memref<128x128xf32, #tpu.memory_space<vmem>>, %arg3: memref<1x128xf32, #tpu.memory_space<vmem>>, %arg4: memref<128x256xf32, #tpu.memory_space<vmem>>, %arg5: memref<1x256xf32, #tpu.memory_space<vmem>>, %arg6: memref<256x384xf32, #tpu.memory_space<vmem>>, %arg7: memref<1x384xf32, #tpu.memory_space<vmem>>, %arg8: memref<384x128xf32, #tpu.memory_space<vmem>>, %arg9: memref<1x128xf32, #tpu.memory_space<vmem>>, %arg10: memref<32x128xf32, #tpu.memory_space<vmem>>) attributes {dimension_semantics = [#tpu.dimension_semantics<parallel>], iteration_bounds = array<i64: 2>, scalar_prefetch = 0 : i64, scratch_operands = 0 : i64, tpu.core_type = #tpu.core_type<tc>, window_params = [{transform_indices = @transform_0, window_bounds = array<i64: 32, 128>}, {pipeline_mode = #tpu.pipeline_mode<synchronous>, transform_indices = @transform_1, window_bounds = array<i64: 128, 128>}, {pipeline_mode = #tpu.pipeline_mode<synchronous>, transform_indices = @transform_2, window_bounds = array<i64: 1, 128>}, {pipeline_mode = #tpu.pipeline_mode<synchronous>, transform_indices = @transform_3, window_bounds = array<i64: 128, 256>}, {pipeline_mode = #tpu.pipeline_mode<synchronous>, transform_indices = @transform_4, window_bounds = array<i64: 1, 256>}, {pipeline_mode = #tpu.pipeline_mode<synchronous>, transform_indices = @transform_5, window_bounds = array<i64: 256, 384>}, {pipeline_mode = #tpu.pipeline_mode<synchronous>, transform_indices = @transform_6, window_bounds = array<i64: 1, 384>}, {pipeline_mode = #tpu.pipeline_mode<synchronous>, transform_indices = @transform_7, window_bounds = array<i64: 384, 128>}, {pipeline_mode = #tpu.pipeline_mode<synchronous>, transform_indices = @transform_8, window_bounds = array<i64: 1, 128>}, {transform_indices = @transform_9, window_bounds = array<i64: 32, 128>}]} {
    %c0 = arith.constant 0 : index
    %c0_0 = arith.constant 0 : index
    %0 = vector.load %arg1[%c0, %c0_0] : memref<32x128xf32, #tpu.memory_space<vmem>>, vector<32x128xf32>
    %c0_1 = arith.constant 0 : index
    %c0_2 = arith.constant 0 : index
    %1 = vector.load %arg2[%c0_1, %c0_2] : memref<128x128xf32, #tpu.memory_space<vmem>>, vector<128x128xf32>
    %cst = arith.constant dense<0.000000e+00> : vector<32x128xf32>
    %2 = tpu.matmul %0, %1, %cst {dimension_numbers = #tpu.dot_dimension_numbers<[1], [0], [0], [1], [0, 0, 1, 1], [], []>} : vector<32x128xf32>, vector<128x128xf32>, vector<32x128xf32> -> vector<32x128xf32>
    %c0_3 = arith.constant 0 : index
    %c0_4 = arith.constant 0 : index
    %3 = vector.load %arg3[%c0_3, %c0_4] : memref<1x128xf32, #tpu.memory_space<vmem>>, vector<1x128xf32>
    %4 = vector.broadcast %3 : vector<1x128xf32> to vector<32x128xf32>
    %5 = arith.addf %2, %4 : vector<32x128xf32>
    %cst_5 = arith.constant 0.000000e+00 : f32
    %6 = vector.broadcast %cst_5 : f32 to vector<32x128xf32>
    %7 = arith.maximumf %5, %6 : vector<32x128xf32>
    %c0_6 = arith.constant 0 : index
    %c0_7 = arith.constant 0 : index
    %8 = vector.load %arg4[%c0_6, %c0_7] : memref<128x256xf32, #tpu.memory_space<vmem>>, vector<128x256xf32>
    %cst_8 = arith.constant dense<0.000000e+00> : vector<32x256xf32>
    %9 = tpu.matmul %7, %8, %cst_8 {dimension_numbers = #tpu.dot_dimension_numbers<[1], [0], [0], [1], [0, 0, 1, 1], [], []>} : vector<32x128xf32>, vector<128x256xf32>, vector<32x256xf32> -> vector<32x256xf32>
    %c0_9 = arith.constant 0 : index
    %c0_10 = arith.constant 0 : index
    %10 = vector.load %arg5[%c0_9, %c0_10] : memref<1x256xf32, #tpu.memory_space<vmem>>, vector<1x256xf32>
    %11 = vector.broadcast %10 : vector<1x256xf32> to vector<32x256xf32>
    %12 = arith.addf %9, %11 : vector<32x256xf32>
    %cst_11 = arith.constant 0.000000e+00 : f32
    %13 = vector.broadcast %cst_11 : f32 to vector<32x256xf32>
    %14 = arith.maximumf %12, %13 : vector<32x256xf32>
    %c0_12 = arith.constant 0 : index
    %c0_13 = arith.constant 0 : index
    %15 = vector.load %arg6[%c0_12, %c0_13] : memref<256x384xf32, #tpu.memory_space<vmem>>, vector<256x384xf32>
    %cst_14 = arith.constant dense<0.000000e+00> : vector<32x384xf32>
    %16 = tpu.matmul %14, %15, %cst_14 {dimension_numbers = #tpu.dot_dimension_numbers<[1], [0], [0], [1], [0, 0, 1, 1], [], []>} : vector<32x256xf32>, vector<256x384xf32>, vector<32x384xf32> -> vector<32x384xf32>
    %c0_15 = arith.constant 0 : index
    %c0_16 = arith.constant 0 : index
    %17 = vector.load %arg7[%c0_15, %c0_16] : memref<1x384xf32, #tpu.memory_space<vmem>>, vector<1x384xf32>
    %18 = vector.broadcast %17 : vector<1x384xf32> to vector<32x384xf32>
    %19 = arith.addf %16, %18 : vector<32x384xf32>
    %cst_17 = arith.constant 0.000000e+00 : f32
    %20 = vector.broadcast %cst_17 : f32 to vector<32x384xf32>
    %21 = arith.maximumf %19, %20 : vector<32x384xf32>
    %c0_18 = arith.constant 0 : index
    %c0_19 = arith.constant 0 : index
    %22 = vector.load %arg8[%c0_18, %c0_19] : memref<384x128xf32, #tpu.memory_space<vmem>>, vector<384x128xf32>
    %cst_20 = arith.constant dense<0.000000e+00> : vector<32x128xf32>
    %23 = tpu.matmul %21, %22, %cst_20 {dimension_numbers = #tpu.dot_dimension_numbers<[1], [0], [0], [1], [0, 0, 1, 1], [], []>} : vector<32x384xf32>, vector<384x128xf32>, vector<32x128xf32> -> vector<32x128xf32>
    %c0_21 = arith.constant 0 : index
    %c0_22 = arith.constant 0 : index
    %24 = vector.load %arg9[%c0_21, %c0_22] : memref<1x128xf32, #tpu.memory_space<vmem>>, vector<1x128xf32>
    %25 = vector.broadcast %24 : vector<1x128xf32> to vector<32x128xf32>
    %26 = arith.addf %23, %25 : vector<32x128xf32>
    %c0_23 = arith.constant 0 : index
    %c0_24 = arith.constant 0 : index
    %27 = vector.load %arg10[%c0_23, %c0_24] : memref<32x128xf32, #tpu.memory_space<vmem>>, vector<32x128xf32>
    tpu.vector_store %arg10[%c0_23, %c0_24], %26 {strides = array<i32>} : memref<32x128xf32, #tpu.memory_space<vmem>>, vector<32x128xf32>,
    return
  }
  func.func @transform_0(%arg0: i32) -> (i32, i32) {
    %c0_i32 = arith.constant 0 : i32
    %c0_i32_0 = arith.constant 0 : i32
    return %arg0, %c0_i32 : i32, i32
  }
  func.func @transform_1(%arg0: i32) -> (i32, i32) {
    %c0_i32 = arith.constant 0 : i32
    %c0_i32_0 = arith.constant 0 : i32
    %c0_i32_1 = arith.constant 0 : i32
    return %c0_i32, %c0_i32_0 : i32, i32
  }
  func.func @transform_2(%arg0: i32) -> (i32, i32) {
    %c0_i32 = arith.constant 0 : i32
    %c0_i32_0 = arith.constant 0 : i32
    %c0_i32_1 = arith.constant 0 : i32
    return %c0_i32, %c0_i32_0 : i32, i32
  }
  func.func @transform_3(%arg0: i32) -> (i32, i32) {
    %c0_i32 = arith.constant 0 : i32
    %c0_i32_0 = arith.constant 0 : i32
    %c0_i32_1 = arith.constant 0 : i32
    return %c0_i32, %c0_i32_0 : i32, i32
  }
  func.func @transform_4(%arg0: i32) -> (i32, i32) {
    %c0_i32 = arith.constant 0 : i32
    %c0_i32_0 = arith.constant 0 : i32
    %c0_i32_1 = arith.constant 0 : i32
    return %c0_i32, %c0_i32_0 : i32, i32
  }
  func.func @transform_5(%arg0: i32) -> (i32, i32) {
    %c0_i32 = arith.constant 0 : i32
    %c0_i32_0 = arith.constant 0 : i32
    %c0_i32_1 = arith.constant 0 : i32
    return %c0_i32, %c0_i32_0 : i32, i32
  }
  func.func @transform_6(%arg0: i32) -> (i32, i32) {
    %c0_i32 = arith.constant 0 : i32
    %c0_i32_0 = arith.constant 0 : i32
    %c0_i32_1 = arith.constant 0 : i32
    return %c0_i32, %c0_i32_0 : i32, i32
  }
  func.func @transform_7(%arg0: i32) -> (i32, i32) {
    %c0_i32 = arith.constant 0 : i32
    %c0_i32_0 = arith.constant 0 : i32
    %c0_i32_1 = arith.constant 0 : i32
    return %c0_i32, %c0_i32_0 : i32, i32
  }
  func.func @transform_8(%arg0: i32) -> (i32, i32) {
    %c0_i32 = arith.constant 0 : i32
    %c0_i32_0 = arith.constant 0 : i32
    %c0_i32_1 = arith.constant 0 : i32
    return %c0_i32, %c0_i32_0 : i32, i32
  }
  func.func @transform_9(%arg0: i32) -> (i32, i32) {
    %c0_i32 = arith.constant 0 : i32
    %c0_i32_0 = arith.constant 0 : i32
    return %arg0, %c0_i32 : i32, i32
  }
}

</mosaic_0001>

<llo_original>
// kernel: tpu_custom_call.1
$region0: #{tpu_custom_call.1}
  #allocation0 [shape = 'u32[]', space=smem, size = 0x4, offset = 0x4, fixed_abs, tag = 'smem constant byte address 0x4 - core index']
  #allocation1 [shape = 'u32[72,128]{1,0:T(1,128)}', space=vmem, size = 0x9000, scoped, tag = 'internal scratch']
  %s0 = inlined_call_operand.hbm [shape: f32[64,128], index: 0, kind: input, shape index: {}]
  %s1 = inlined_call_operand.hbm [shape: f32[128,128], index: 1, kind: input, shape index: {}]
  %s2 = inlined_call_operand.hbm [shape: f32[1,128], index: 2, kind: input, shape index: {}]
  %s3 = inlined_call_operand.hbm [shape: f32[128,256], index: 3, kind: input, shape index: {}]
  %s4 = inlined_call_operand.vmem [shape: f32[1,256], index: 4, kind: input, shape index: {}]
  %s5 = inlined_call_operand.hbm [shape: f32[256,384], index: 5, kind: input, shape index: {}]
  %s6 = inlined_call_operand.vmem [shape: f32[1,384], index: 6, kind: input, shape index: {}]
  %s7 = inlined_call_operand.hbm [shape: f32[384,128], index: 7, kind: input, shape index: {}]
  %s8 = inlined_call_operand.vmem [shape: f32[1,128], index: 8, kind: input, shape index: {}]
  %s9 = inlined_call_operand.hbm [shape: f32[64,128], index: 9, kind: output, shape index: {}]
  %s10 = sld [smem:[#allocation0]]
  $region93: #{tpu_custom_call.1} parent=0
    _
  %s12 = ssub.s32 1, %s10
  %s13 = scalar_select 0, %s12, %s10
  $region1: #{tpu_custom_call.1} parent=0
    #allocation2 [shape = 'u8[32768]{0}', space=vmem, size = 0x8000, scoped, tag = 'input window, operand 0']
    #allocation3 [shape = 's32[2]{0}', space=sflag, size = 0x8, scoped, tag = 'scoped memory for tpu_custom_call.1']
    #allocation4 [shape = 's32[2]{0}', space=sflag, size = 0x8, scoped, tag = 'scoped memory for tpu_custom_call.1']
    #allocation5 [shape = 'u8[65536]{0}', space=vmem, size = 0x10000, scoped, tag = 'input window, operand 1, single buffered']
    #allocation6 [shape = 's32[1]{0}', space=sflag, size = 0x4, scoped, tag = 'scoped memory for tpu_custom_call.1']
    #allocation7 [shape = 'u8[512]{0}', space=vmem, size = 0x400, scoped, tag = 'input window, operand 2, single buffered']
    #allocation8 [shape = 'u8[131072]{0}', space=vmem, size = 0x20000, scoped, tag = 'input window, operand 3, single buffered']
    #allocation9 [shape = 's32[1]{0}', space=sflag, size = 0x4, scoped, tag = 'scoped memory for tpu_custom_call.1']
    #allocation10 [shape = 'u8[393216]{0}', space=vmem, size = 0x60000, scoped, tag = 'input window, operand 5, single buffered']
    #allocation11 [shape = 'u8[196608]{0}', space=vmem, size = 0x30000, scoped, tag = 'input window, operand 7, single buffered']
    #allocation12 [shape = 's32[1]{0}', space=sflag, size = 0x4, scoped, tag = 'scoped memory for tpu_custom_call.1']
    #allocation13 [shape = 'u8[32768]{0}', space=vmem, size = 0x8000, scoped, tag = 'output window, operand 0']
    %14 = vsyncpa [#allocation3], 0
    %s15 = scalar_lea.sflag [#allocation3], 1
    %16 = vsyncpa %s15, 0
    %17 = vsyncpa [#allocation6], 0
    %18 = vsyncpa [#allocation9], 0
    %19 = vsyncpa [#allocation12], 0
    %20 = vsyncpa [#allocation4], 0
    %s21 = scalar_lea.sflag [#allocation4], 1
    %22 = vsyncpa %s21, 0
    loop: start=0, step=1, limit=4
    $region2: #{tpu_custom_call.1} parent=1 // loop_pre_header
      _
    $region3: #{tpu_custom_call.1} parent=1 // loop_header
      %s24 = sphi 0, %s28
      %p25 = scmp.ge.s32.totalorder %s24, 4
      %s34 = sphi 0, %s36
      %s37 = sphi 0, %s34
      %s38 = sphi 0, %s37
      %s54 = sphi 0, %s38
      %s58 = sphi 0, %s58
      %s60 = sphi 0, %s58
      %s61 = sphi 0, %s60
      %s75 = sphi 0, %s61
      %s79 = sphi 0, %s79
      %s81 = sphi 0, %s79
      %s82 = sphi 0, %s81
      %s96 = sphi 0, %s82
      %s100 = sphi 0, %s100
      %s102 = sphi 0, %s100
      %s103 = sphi 0, %s102
      %s117 = sphi 0, %s103
      %s121 = sphi 0, %s121
      %s123 = sphi 0, %s121
      %s124 = sphi 0, %s123
      %s138 = sphi 0, %s124
      %s142 = sphi 0, %s142
      %s144 = sphi 0, %s142
      %s145 = sphi 0, %s144
      %s159 = sphi 0, %s145
      %s163 = sphi 0, %s163
      %s165 = sphi 0, %s163
      %s166 = sphi 0, %s165
      %s180 = sphi 0, %s166
      %s184 = sphi 0, %s184
      %s186 = sphi 0, %s184
      %s187 = sphi 0, %s186
      %s201 = sphi 0, %s187
      %s205 = sphi 0, %s205
      %s207 = sphi 0, %s205
      %s208 = sphi 0, %s207
      %s222 = sphi 0, %s208
      %s228 = sphi 0, %s230
      %s231 = sphi 0, %s228
      %s232 = sphi 0, %s231
      %s248 = sphi 0, %s232
    $region4: #{tpu_custom_call.1} parent=1 // loop_header_branch
      %27 = sbr.rel (%p25) target = $region8
    $region5: #{tpu_custom_call.1} parent=1 // loop_body
      %s29 = ssub.s32 %s24, 1
      %s30 = ssub.s32 %s24, 2
      %s31 = sadd.s32 %s24, 1
      %s32 = ssub.s32 %s24, %s31
      %p33 = scmp.eq.s32.totalorder %s32, 0
      %s35 = sadd.s32 %s34, 1
      %s36 = scalar_select %p33, %s34, %s35
      %p39 = pneg %p33
      %p40 = scmp.eq.s32.totalorder %s24, 1
      %p41 = por %p39, %p40
      %p42 = scmp.ne.s32.totalorder %s34, %s37
      %p43 = scmp.eq.s32.totalorder %s24, 0
      %p44 = por %p42, %p43
      %p45 = scmp.ne.s32.totalorder %s34, %s37
      %p46 = scmp.eq.s32.totalorder %s29, 1
      %p47 = por %p45, %p46
      %p48 = scmp.ne.s32.totalorder %s37, %s38
      %p49 = scmp.eq.s32.totalorder %s29, 0
      %p50 = por %p48, %p49
      %p51 = scmp.ne.s32.totalorder %s37, %s38
      %p52 = scmp.eq.s32.totalorder %s30, 1
      %p53 = por %p51, %p52
      %p55 = scmp.ne.s32.totalorder %s38, %s54
      %p56 = scmp.eq.s32.totalorder %s30, 0
      %p57 = por %p55, %p56
      %s59 = sadd.s32 %s58, 1
      %p62 = scmp.eq.s32.totalorder %s24, 1
      %p63 = scmp.ne.s32.totalorder %s58, %s60
      %p64 = scmp.eq.s32.totalorder %s24, 0
      %p65 = por %p63, %p64
      %p66 = scmp.ne.s32.totalorder %s58, %s60
      %p67 = scmp.eq.s32.totalorder %s29, 1
      %p68 = por %p66, %p67
      %p69 = scmp.ne.s32.totalorder %s60, %s61
      %p70 = scmp.eq.s32.totalorder %s29, 0
      %p71 = por %p69, %p70
      %p72 = scmp.ne.s32.totalorder %s60, %s61
      %p73 = scmp.eq.s32.totalorder %s30, 1
      %p74 = por %p72, %p73
      %p76 = scmp.ne.s32.totalorder %s61, %s75
      %p77 = scmp.eq.s32.totalorder %s30, 0
      %p78 = por %p76, %p77
      %s80 = sadd.s32 %s79, 1
      %p83 = scmp.eq.s32.totalorder %s24, 1
      %p84 = scmp.ne.s32.totalorder %s79, %s81
      %p85 = scmp.eq.s32.totalorder %s24, 0
      %p86 = por %p84, %p85
      %p87 = scmp.ne.s32.totalorder %s79, %s81
      %p88 = scmp.eq.s32.totalorder %s29, 1
      %p89 = por %p87, %p88
      %p90 = scmp.ne.s32.totalorder %s81, %s82
      %p91 = scmp.eq.s32.totalorder %s29, 0
      %p92 = por %p90, %p91
      %p93 = scmp.ne.s32.totalorder %s81, %s82
      %p94 = scmp.eq.s32.totalorder %s30, 1
      %p95 = por %p93, %p94
      %p97 = scmp.ne.s32.totalorder %s82, %s96
      %p98 = scmp.eq.s32.totalorder %s30, 0
      %p99 = por %p97, %p98
      %s101 = sadd.s32 %s100, 1
      %p104 = scmp.eq.s32.totalorder %s24, 1
      %p105 = scmp.ne.s32.totalorder %s100, %s102
      %p106 = scmp.eq.s32.totalorder %s24, 0
      %p107 = por %p105, %p106
      %p108 = scmp.ne.s32.totalorder %s100, %s102
      %p109 = scmp.eq.s32.totalorder %s29, 1
      %p110 = por %p108, %p109
      %p111 = scmp.ne.s32.totalorder %s102, %s103
      %p112 = scmp.eq.s32.totalorder %s29, 0
      %p113 = por %p111, %p112
      %p114 = scmp.ne.s32.totalorder %s102, %s103
      %p115 = scmp.eq.s32.totalorder %s30, 1
      %p116 = por %p114, %p115
      %p118 = scmp.ne.s32.totalorder %s103, %s117
      %p119 = scmp.eq.s32.totalorder %s30, 0
      %p120 = por %p118, %p119
      %s122 = sadd.s32 %s121, 1
      %p125 = scmp.eq.s32.totalorder %s24, 1
      %p126 = scmp.ne.s32.totalorder %s121, %s123
      %p127 = scmp.eq.s32.totalorder %s24, 0
      %p128 = por %p126, %p127
      %p129 = scmp.ne.s32.totalorder %s121, %s123
      %p130 = scmp.eq.s32.totalorder %s29, 1
      %p131 = por %p129, %p130
      %p132 = scmp.ne.s32.totalorder %s123, %s124
      %p133 = scmp.eq.s32.totalorder %s29, 0
      %p134 = por %p132, %p133
      %p135 = scmp.ne.s32.totalorder %s123, %s124
      %p136 = scmp.eq.s32.totalorder %s30, 1
      %p137 = por %p135, %p136
      %p139 = scmp.ne.s32.totalorder %s124, %s138
      %p140 = scmp.eq.s32.totalorder %s30, 0
      %p141 = por %p139, %p140
      %s143 = sadd.s32 %s142, 1
      %p146 = scmp.eq.s32.totalorder %s24, 1
      %p147 = scmp.ne.s32.totalorder %s142, %s144
      %p148 = scmp.eq.s32.totalorder %s24, 0
      %p149 = por %p147, %p148
      %p150 = scmp.ne.s32.totalorder %s142, %s144
      %p151 = scmp.eq.s32.totalorder %s29, 1
      %p152 = por %p150, %p151
      %p153 = scmp.ne.s32.totalorder %s144, %s145
      %p154 = scmp.eq.s32.totalorder %s29, 0
      %p155 = por %p153, %p154
      %p156 = scmp.ne.s32.totalorder %s144, %s145
      %p157 = scmp.eq.s32.totalorder %s30, 1
      %p158 = por %p156, %p157
      %p160 = scmp.ne.s32.totalorder %s145, %s159
      %p161 = scmp.eq.s32.totalorder %s30, 0
      %p162 = por %p160, %p161
      %s164 = sadd.s32 %s163, 1
      %p167 = scmp.eq.s32.totalorder %s24, 1
      %p168 = scmp.ne.s32.totalorder %s163, %s165
      %p169 = scmp.eq.s32.totalorder %s24, 0
      %p170 = por %p168, %p169
      %p171 = scmp.ne.s32.totalorder %s163, %s165
      %p172 = scmp.eq.s32.totalorder %s29, 1
      %p173 = por %p171, %p172
      %p174 = scmp.ne.s32.totalorder %s165, %s166
      %p175 = scmp.eq.s32.totalorder %s29, 0
      %p176 = por %p174, %p175
      %p177 = scmp.ne.s32.totalorder %s165, %s166
      %p178 = scmp.eq.s32.totalorder %s30, 1
      %p179 = por %p177, %p178
      %p181 = scmp.ne.s32.totalorder %s166, %s180
      %p182 = scmp.eq.s32.totalorder %s30, 0
      %p183 = por %p181, %p182
      %s185 = sadd.s32 %s184, 1
      %p188 = scmp.eq.s32.totalorder %s24, 1
      %p189 = scmp.ne.s32.totalorder %s184, %s186
      %p190 = scmp.eq.s32.totalorder %s24, 0
      %p191 = por %p189, %p190
      %p192 = scmp.ne.s32.totalorder %s184, %s186
      %p193 = scmp.eq.s32.totalorder %s29, 1
      %p194 = por %p192, %p193
      %p195 = scmp.ne.s32.totalorder %s186, %s187
      %p196 = scmp.eq.s32.totalorder %s29, 0
      %p197 = por %p195, %p196
      %p198 = scmp.ne.s32.totalorder %s186, %s187
      %p199 = scmp.eq.s32.totalorder %s30, 1
      %p200 = por %p198, %p199
      %p202 = scmp.ne.s32.totalorder %s187, %s201
      %p203 = scmp.eq.s32.totalorder %s30, 0
      %p204 = por %p202, %p203
      %s206 = sadd.s32 %s205, 1
      %p209 = scmp.eq.s32.totalorder %s24, 1
      %p210 = scmp.ne.s32.totalorder %s205, %s207
      %p211 = scmp.eq.s32.totalorder %s24, 0
      %p212 = por %p210, %p211
      %p213 = scmp.ne.s32.totalorder %s205, %s207
      %p214 = scmp.eq.s32.totalorder %s29, 1
      %p215 = por %p213, %p214
      %p216 = scmp.ne.s32.totalorder %s207, %s208
      %p217 = scmp.eq.s32.totalorder %s29, 0
      %p218 = por %p216, %p217
      %p219 = scmp.ne.s32.totalorder %s207, %s208
      %p220 = scmp.eq.s32.totalorder %s30, 1
      %p221 = por %p219, %p220
      %p223 = scmp.ne.s32.totalorder %s208, %s222
      %p224 = scmp.eq.s32.totalorder %s30, 0
      %p225 = por %p223, %p224
      %s226 = ssub.s32 %s24, %s31
      %p227 = scmp.eq.s32.totalorder %s226, 0
      %s229 = sadd.s32 %s228, 1
      %s230 = scalar_select %p227, %s228, %s229
      %p233 = pneg %p227
      %p234 = scmp.eq.s32.totalorder %s24, 1
      %p235 = por %p233, %p234
      %p236 = scmp.ne.s32.totalorder %s228, %s231
      %p237 = scmp.eq.s32.totalorder %s24, 0
      %p238 = por %p236, %p237
      %p239 = scmp.ne.s32.totalorder %s228, %s231
      %p240 = scmp.eq.s32.totalorder %s29, 1
      %p241 = por %p239, %p240
      %p242 = scmp.ne.s32.totalorder %s231, %s232
      %p243 = scmp.eq.s32.totalorder %s29, 0
      %p244 = por %p242, %p243
      %p245 = scmp.ne.s32.totalorder %s231, %s232
      %p246 = scmp.eq.s32.totalorder %s30, 1
      %p247 = por %p245, %p246
      %p249 = scmp.ne.s32.totalorder %s232, %s248
      %p250 = scmp.eq.s32.totalorder %s30, 0
      %p251 = por %p249, %p250
      %p252 = scmp.le.s32.totalorder 1, %s24
      %p253 = scmp.lt.s32.totalorder %s24, 3
      %p254 = pnand %p252, %p253
      %p255 = pneg %p254
      // Predicated region
      $region9: #{tpu_custom_call.1} parent=5 // pred_check
        _
      $region10: #{tpu_custom_call.1} parent=5 // pred_check_branch
        %257 = sbr.rel (%p254) target = $region12
      $region11: #{tpu_custom_call.1} parent=5 // pred_region
        %s258 = ssub.s32 %s24, 1
        // Predicated region
        $region13: #{tpu_custom_call.1} parent=11 // pred_check
          %p259 = pneg %p71
        $region14: #{tpu_custom_call.1} parent=11 // pred_check_branch
          %261 = sbr.rel (%p259) target = $region16
        $region15: #{tpu_custom_call.1} parent=11 // pred_region
          %263 = vsyncadd [#allocation6], 0
          %s264 = sshll.u32 %s1, 4
          %s265 = int_to_ptr.hbm [resolvable:$true] %s264
          %s266 = sshll.u32 [#allocation5], 4
          %s267 = int_to_ptr.vmem [resolvable:$true] %s266
          %272 = dma.hbm_to_vmem [thread:$0]  %s265, 2048, %s267, [#allocation6], 128, 128, 8
        $region16: #{tpu_custom_call.1} parent=11 // pred_fallthru
          _
        // Predicated region
        $region17: #{tpu_custom_call.1} parent=11 // pred_check
          %p273 = pneg %p92
        $region18: #{tpu_custom_call.1} parent=11 // pred_check_branch
          %275 = sbr.rel (%p273) target = $region20
        $region19: #{tpu_custom_call.1} parent=11 // pred_region
          %277 = vsyncadd [#allocation6], 0
          %s279 = sshll.u32 %s2, 4
          %s280 = int_to_ptr.hbm [resolvable:$true] %s279
          %s281 = sshll.u32 [#allocation7], 4
          %s282 = int_to_ptr.vmem [resolvable:$true] %s281
          %284 = dma.hbm_to_vmem [thread:$0]  %s280, 16, %s282, [#allocation6]
        $region20: #{tpu_custom_call.1} parent=11 // pred_fallthru
          _
        // Predicated region
        $region21: #{tpu_custom_call.1} parent=11 // pred_check
          %p285 = pneg %p113
        $region22: #{tpu_custom_call.1} parent=11 // pred_check_branch
          %287 = sbr.rel (%p285) target = $region24
        $region23: #{tpu_custom_call.1} parent=11 // pred_region
          %289 = vsyncadd [#allocation9], 0
          %s290 = sshll.u32 %s3, 4
          %s291 = int_to_ptr.hbm [resolvable:$true] %s290
          %s292 = sshll.u32 [#allocation8], 4
          %s293 = int_to_ptr.vmem [resolvable:$true] %s292
          %298 = dma.hbm_to_vmem [thread:$0]  %s291, 4096, %s293, [#allocation9], 256, 256, 16
        $region24: #{tpu_custom_call.1} parent=11 // pred_fallthru
          _
        // Predicated region
        $region25: #{tpu_custom_call.1} parent=11 // pred_check
          %p299 = pneg %p134
        $region26: #{tpu_custom_call.1} parent=11 // pred_check_branch
          %301 = sbr.rel (%p299) target = $region28
        $region27: #{tpu_custom_call.1} parent=11 // pred_region
          _
        $region28: #{tpu_custom_call.1} parent=11 // pred_fallthru
          _
        // Predicated region
        $region29: #{tpu_custom_call.1} parent=11 // pred_check
          %p302 = pneg %p155
        $region30: #{tpu_custom_call.1} parent=11 // pred_check_branch
          %304 = sbr.rel (%p302) target = $region32
        $region31: #{tpu_custom_call.1} parent=11 // pred_region
          %306 = vsyncadd [#allocation9], 0
          %s307 = sshll.u32 %s5, 4
          %s308 = int_to_ptr.hbm [resolvable:$true] %s307
          %s309 = sshll.u32 [#allocation10], 4
          %s310 = int_to_ptr.vmem [resolvable:$true] %s309
          %315 = dma.hbm_to_vmem [thread:$0]  %s308, 12288, %s310, [#allocation9], 384, 384, 24
        $region32: #{tpu_custom_call.1} parent=11 // pred_fallthru
          _
        // Predicated region
        $region33: #{tpu_custom_call.1} parent=11 // pred_check
          %p316 = pneg %p176
        $region34: #{tpu_custom_call.1} parent=11 // pred_check_branch
          %318 = sbr.rel (%p316) target = $region36
        $region35: #{tpu_custom_call.1} parent=11 // pred_region
          _
        $region36: #{tpu_custom_call.1} parent=11 // pred_fallthru
          _
        // Predicated region
        $region37: #{tpu_custom_call.1} parent=11 // pred_check
          %p319 = pneg %p197
        $region38: #{tpu_custom_call.1} parent=11 // pred_check_branch
          %321 = sbr.rel (%p319) target = $region40
        $region39: #{tpu_custom_call.1} parent=11 // pred_region
          %323 = vsyncadd [#allocation12], 0
          %s324 = sshll.u32 %s7, 4
          %s325 = int_to_ptr.hbm [resolvable:$true] %s324
          %s326 = sshll.u32 [#allocation11], 4
          %s327 = int_to_ptr.vmem [resolvable:$true] %s326
          %332 = dma.hbm_to_vmem [thread:$0]  %s325, 6144, %s327, [#allocation12], 128, 128, 8
        $region40: #{tpu_custom_call.1} parent=11 // pred_fallthru
          _
        // Predicated region
        $region41: #{tpu_custom_call.1} parent=11 // pred_check
          %p333 = pneg %p218
        $region42: #{tpu_custom_call.1} parent=11 // pred_check_branch
          %335 = sbr.rel (%p333) target = $region44
        $region43: #{tpu_custom_call.1} parent=11 // pred_region
          _
        $region44: #{tpu_custom_call.1} parent=11 // pred_fallthru
          _
      $region12: #{tpu_custom_call.1} parent=5 // pred_fallthru
        _
      %p336 = scmp.lt.s32.totalorder %s24, 2
      // Predicated region
      $region45: #{tpu_custom_call.1} parent=5 // pred_check
        %p337 = pneg %p336
      $region46: #{tpu_custom_call.1} parent=5 // pred_check_branch
        %339 = sbr.rel (%p337) target = $region48
      $region47: #{tpu_custom_call.1} parent=5 // pred_region
        // Predicated region
        $region49: #{tpu_custom_call.1} parent=47 // pred_check
          %p340 = pneg %p44
        $region50: #{tpu_custom_call.1} parent=47 // pred_check_branch
          %342 = sbr.rel (%p340) target = $region52
        $region51: #{tpu_custom_call.1} parent=47 // pred_region
          %s343 = sand.u32 %s34, 1
          %s344 = scalar_lea.sflag [#allocation3], %s343
          %s345 = sand.u32 %s34, 1
          %s346 = smul.addr %s345, 32
          %s347 = scalar_lea.vmem [#allocation2], %s346
          %s348 = smul.u32 4, %s24
          %350 = vsyncadd %s344, 0
          %s351 = smul.addr %s348, 8
          %s352 = scalar_lea.hbm %s0, %s351
          %s353 = sshll.u32 %s352, 4
          %s354 = int_to_ptr.hbm [resolvable:$true] %s353
          %s355 = sshll.u32 %s347, 4
          %s356 = int_to_ptr.vmem [resolvable:$true] %s355
          %361 = dma.hbm_to_vmem [thread:$0]  %s354, 512, %s356, %s344, 128, 128, 8
        $region52: #{tpu_custom_call.1} parent=47 // pred_fallthru
          _
      $region48: #{tpu_custom_call.1} parent=5 // pred_fallthru
        _
      %p362 = scmp.le.s32.totalorder 1, %s24
      %p363 = scmp.lt.s32.totalorder %s24, 3
      %p364 = pnand %p362, %p363
      %p365 = pneg %p364
      // Predicated region
      $region53: #{tpu_custom_call.1} parent=5 // pred_check
        _
      $region54: #{tpu_custom_call.1} parent=5 // pred_check_branch
        %367 = sbr.rel (%p364) target = $region56
      $region55: #{tpu_custom_call.1} parent=5 // pred_region
        %s368 = ssub.s32 %s24, 1
        %s369 = sand.u32 %s37, 1
        %s370 = scalar_lea.sflag [#allocation3], %s369
        %s371 = sand.u32 %s37, 1
        %s372 = smul.addr %s371, 32
        %s373 = scalar_lea.vmem [#allocation2], %s372
        // Predicated region
        $region57: #{tpu_custom_call.1} parent=55 // pred_check
          %p374 = pneg %p50
        $region58: #{tpu_custom_call.1} parent=55 // pred_check_branch
          %376 = sbr.rel (%p374) target = $region60
        $region59: #{tpu_custom_call.1} parent=55 // pred_region
          %378 = dma.done %s370, 512
        $region60: #{tpu_custom_call.1} parent=55 // pred_fallthru
          _
        // Predicated region
        $region61: #{tpu_custom_call.1} parent=55 // pred_check
          %p379 = pneg %p71
        $region62: #{tpu_custom_call.1} parent=55 // pred_check_branch
          %381 = sbr.rel (%p379) target = $region64
        $region63: #{tpu_custom_call.1} parent=55 // pred_region
          %383 = dma.done [#allocation6], 2048
        $region64: #{tpu_custom_call.1} parent=55 // pred_fallthru
          _
        // Predicated region
        $region65: #{tpu_custom_call.1} parent=55 // pred_check
          %p384 = pneg %p92
        $region66: #{tpu_custom_call.1} parent=55 // pred_check_branch
          %386 = sbr.rel (%p384) target = $region68
        $region67: #{tpu_custom_call.1} parent=55 // pred_region
          %388 = dma.done [#allocation6], 16
        $region68: #{tpu_custom_call.1} parent=55 // pred_fallthru
          _
        // Predicated region
        $region69: #{tpu_custom_call.1} parent=55 // pred_check
          %p389 = pneg %p113
        $region70: #{tpu_custom_call.1} parent=55 // pred_check_branch
          %391 = sbr.rel (%p389) target = $region72
        $region71: #{tpu_custom_call.1} parent=55 // pred_region
          %393 = dma.done [#allocation9], 4096
        $region72: #{tpu_custom_call.1} parent=55 // pred_fallthru
          _
        // Predicated region
        $region73: #{tpu_custom_call.1} parent=55 // pred_check
          %p394 = pneg %p155
        $region74: #{tpu_custom_call.1} parent=55 // pred_check_branch
          %396 = sbr.rel (%p394) target = $region76
        $region75: #{tpu_custom_call.1} parent=55 // pred_region
          %398 = dma.done [#allocation9], 12288
        $region76: #{tpu_custom_call.1} parent=55 // pred_fallthru
          _
        // Predicated region
        $region77: #{tpu_custom_call.1} parent=55 // pred_check
          %p399 = pneg %p197
        $region78: #{tpu_custom_call.1} parent=55 // pred_check_branch
          %401 = sbr.rel (%p399) target = $region80
        $region79: #{tpu_custom_call.1} parent=55 // pred_region
          %403 = dma.done [#allocation12], 6144
        $region80: #{tpu_custom_call.1} parent=55 // pred_fallthru
          _
        %s404 = sand.u32 %s37, 1
        %s405 = scalar_lea.sflag [#allocation3], %s404
        %s406 = sand.u32 %s37, 1
        %s407 = smul.addr %s406, 32
        %s408 = scalar_lea.vmem [#allocation2], %s407
        %p409 = pneg %p50
        %p410 = pneg %p47
        %p411 = pneg %p71
        %p412 = pneg %p68
        %p413 = pneg %p92
        %p414 = pneg %p89
        %p415 = pneg %p113
        %p416 = pneg %p110
        %p417 = pneg %p134
        %p418 = pneg %p131
        %p419 = pneg %p155
        %p420 = pneg %p152
        %p421 = pneg %p176
        %p422 = pneg %p173
        %p423 = pneg %p197
        %p424 = pneg %p194
        %p425 = pneg %p218
        %p426 = pneg %p215
        %p427 = pneg %p244
        %p428 = pneg %p241
        %s429 = sand.u32 %s231, 1
        %s430 = scalar_lea.sflag [#allocation4], %s429
        %s431 = sand.u32 %s231, 1
        %s432 = smul.addr %s431, 32
        %s433 = scalar_lea.vmem [#allocation13], %s432
        %s434 = smul.u32 4, %s29
        %s435 = smul.u32 4, %s29
        %v436 = vld [vmem:[%s373] sm:$0xff]
        %v437 = vld [vmem:[%s373 + $0x8] sm:$0xff]
        %v438 = vld [vmem:[%s373 + $0x10] sm:$0xff]
        %v439 = vld [vmem:[%s373 + $0x18] sm:$0xff]
        %v440 = vld [vmem:[#allocation5] sm:$0xff]
        %v441 = vld [vmem:[#allocation5 + $0x8] sm:$0xff]
        %v442 = vld [vmem:[#allocation5 + $0x10] sm:$0xff]
        %v443 = vld [vmem:[#allocation5 + $0x18] sm:$0xff]
        %v444 = vld [vmem:[#allocation5 + $0x20] sm:$0xff]
        %v445 = vld [vmem:[#allocation5 + $0x28] sm:$0xff]
        %v446 = vld [vmem:[#allocation5 + $0x30] sm:$0xff]
        %v447 = vld [vmem:[#allocation5 + $0x38] sm:$0xff]
        %v448 = vld [vmem:[#allocation5 + $0x40] sm:$0xff]
        %v449 = vld [vmem:[#allocation5 + $0x48] sm:$0xff]
        %v450 = vld [vmem:[#allocation5 + $0x50] sm:$0xff]
        %v451 = vld [vmem:[#allocation5 + $0x58] sm:$0xff]
        %v452 = vld [vmem:[#allocation5 + $0x60] sm:$0xff]
        %v453 = vld [vmem:[#allocation5 + $0x68] sm:$0xff]
        %v454 = vld [vmem:[#allocation5 + $0x70] sm:$0xff]
        %v455 = vld [vmem:[#allocation5 + $0x78] sm:$0xff]
        %v456 = vld [vmem:[#allocation7] sm:$0x1]
        %v458 = vperm.slane %v456, 0
        %460 = vmatpush.msra.mxu0 %v455
        %461 = vmatpush.msra.mxu0 %v454
        %462 = vmatpush.msra.mxu0 %v453
        %463 = vmatpush.msra.mxu0 %v452
        %464 = vmatpush.msra.mxu0 %v451
        %465 = vmatpush.msra.mxu0 %v450
        %466 = vmatpush.msra.mxu0 %v449
        %467 = vmatpush.msra.mxu0 %v448
        %468 = vmatpush.msra.mxu0 %v447
        %469 = vmatpush.msra.mxu0 %v446
        %470 = vmatpush.msra.mxu0 %v445
        %471 = vmatpush.msra.mxu0 %v444
        %472 = vmatpush.msra.mxu0 %v443
        %473 = vmatpush.msra.mxu0 %v442
        %474 = vmatpush.msra.mxu0 %v441
        %475 = vmatpush.msra.mxu0 %v440
        %476 = vmatmul.f32.gmra.mxu0 %v436
        %v477 = vpop.f32.mrf.mxu0
        %v478 = vadd.f32 %v458, %v477
        %479 = vmatmul.f32.gmra.mxu0 %v437
        %v480 = vpop.f32.mrf.mxu0
        %v481 = vadd.f32 %v458, %v480
        %482 = vmatmul.f32.gmra.mxu0 %v438
        %v483 = vpop.f32.mrf.mxu0
        %v484 = vadd.f32 %v458, %v483
        %485 = vmatmul.f32.gmra.mxu0 %v439
        %v486 = vpop.f32.mrf.mxu0
        %v487 = vadd.f32 %v458, %v486
        %488 = vdwg.mxu0
        %v489 = vmax.f32 %v478, 0.0
        %v490 = vmax.f32 %v481, 0.0
        %v491 = vmax.f32 %v484, 0.0
        %v492 = vmax.f32 %v487, 0.0
        %v493 = vld [vmem:[#allocation8] sm:$0xff]
        %v494 = vld [vmem:[#allocation8 + $0x8] sm:$0xff]
        %v495 = vld [vmem:[#allocation8 + $0x10] sm:$0xff]
        %v496 = vld [vmem:[#allocation8 + $0x18] sm:$0xff]
        %v497 = vld [vmem:[#allocation8 + $0x20] sm:$0xff]
        %v498 = vld [vmem:[#allocation8 + $0x28] sm:$0xff]
        %v499 = vld [vmem:[#allocation8 + $0x30] sm:$0xff]
        %v500 = vld [vmem:[#allocation8 + $0x38] sm:$0xff]
        %v501 = vld [vmem:[#allocation8 + $0x40] sm:$0xff]
        %v502 = vld [vmem:[#allocation8 + $0x48] sm:$0xff]
        %v503 = vld [vmem:[#allocation8 + $0x50] sm:$0xff]
        %v504 = vld [vmem:[#allocation8 + $0x58] sm:$0xff]
        %v505 = vld [vmem:[#allocation8 + $0x60] sm:$0xff]
        %v506 = vld [vmem:[#allocation8 + $0x68] sm:$0xff]
        %v507 = vld [vmem:[#allocation8 + $0x70] sm:$0xff]
        %v508 = vld [vmem:[#allocation8 + $0x78] sm:$0xff]
        %v509 = vld [vmem:[#allocation8 + $0x80] sm:$0xff]
        %v510 = vld [vmem:[#allocation8 + $0x88] sm:$0xff]
        %v511 = vld [vmem:[#allocation8 + $0x90] sm:$0xff]
        %v512 = vld [vmem:[#allocation8 + $0x98] sm:$0xff]
        %v513 = vld [vmem:[#allocation8 + $0xa0] sm:$0xff]
        %v514 = vld [vmem:[#allocation8 + $0xa8] sm:$0xff]
        %v515 = vld [vmem:[#allocation8 + $0xb0] sm:$0xff]
        %v516 = vld [vmem:[#allocation8 + $0xb8] sm:$0xff]
        %v517 = vld [vmem:[#allocation8 + $0xc0] sm:$0xff]
        %v518 = vld [vmem:[#allocation8 + $0xc8] sm:$0xff]
        %v519 = vld [vmem:[#allocation8 + $0xd0] sm:$0xff]
        %v520 = vld [vmem:[#allocation8 + $0xd8] sm:$0xff]
        %v521 = vld [vmem:[#allocation8 + $0xe0] sm:$0xff]
        %v522 = vld [vmem:[#allocation8 + $0xe8] sm:$0xff]
        %v523 = vld [vmem:[#allocation8 + $0xf0] sm:$0xff]
        %v524 = vld [vmem:[#allocation8 + $0xf8] sm:$0xff]
        %v525 = vld [vmem:[%s4] sm:$0x3]
        %v527 = vperm.slane %v525, 0
        %v528 = vperm.slane %v525, 1
        %531 = vmatpush.msra.mxu0 %v523
        %532 = vmatpush.msra.mxu0 %v521
        %533 = vmatpush.msra.mxu0 %v519
        %534 = vmatpush.msra.mxu0 %v517
        %535 = vmatpush.msra.mxu0 %v515
        %536 = vmatpush.msra.mxu0 %v513
        %537 = vmatpush.msra.mxu0 %v511
        %538 = vmatpush.msra.mxu0 %v509
        %539 = vmatpush.msra.mxu0 %v507
        %540 = vmatpush.msra.mxu0 %v505
        %541 = vmatpush.msra.mxu0 %v503
        %542 = vmatpush.msra.mxu0 %v501
        %543 = vmatpush.msra.mxu0 %v499
        %544 = vmatpush.msra.mxu0 %v497
        %545 = vmatpush.msra.mxu0 %v495
        %546 = vmatpush.msra.mxu0 %v493
        %547 = vmatmul.f32.gmra.mxu0 %v489
        %v548 = vpop.f32.mrf.mxu0
        %v549 = vadd.f32 %v527, %v548
        %550 = vmatmul.f32.gmra.mxu0 %v490
        %v551 = vpop.f32.mrf.mxu0
        %v552 = vadd.f32 %v527, %v551
        %553 = vmatmul.f32.gmra.mxu0 %v491
        %v554 = vpop.f32.mrf.mxu0
        %v555 = vadd.f32 %v527, %v554
        %556 = vmatmul.f32.gmra.mxu0 %v492
        %v557 = vpop.f32.mrf.mxu0
        %v558 = vadd.f32 %v527, %v557
        %559 = vdwg.mxu0
        %560 = vmatpush.msra.mxu0 %v524
        %561 = vmatpush.msra.mxu0 %v522
        %562 = vmatpush.msra.mxu0 %v520
        %563 = vmatpush.msra.mxu0 %v518
        %564 = vmatpush.msra.mxu0 %v516
        %565 = vmatpush.msra.mxu0 %v514
        %566 = vmatpush.msra.mxu0 %v512
        %567 = vmatpush.msra.mxu0 %v510
        %568 = vmatpush.msra.mxu0 %v508
        %569 = vmatpush.msra.mxu0 %v506
        %570 = vmatpush.msra.mxu0 %v504
        %571 = vmatpush.msra.mxu0 %v502
        %572 = vmatpush.msra.mxu0 %v500
        %573 = vmatpush.msra.mxu0 %v498
        %574 = vmatpush.msra.mxu0 %v496
        %575 = vmatpush.msra.mxu0 %v494
        %576 = vmatmul.f32.gmra.mxu0 %v489
        %v577 = vpop.f32.mrf.mxu0
        %v578 = vadd.f32 %v528, %v577
        %579 = vmatmul.f32.gmra.mxu0 %v490
        %v580 = vpop.f32.mrf.mxu0
        %v581 = vadd.f32 %v528, %v580
        %582 = vmatmul.f32.gmra.mxu0 %v491
        %v583 = vpop.f32.mrf.mxu0
        %v584 = vadd.f32 %v528, %v583
        %585 = vmatmul.f32.gmra.mxu0 %v492
        %v586 = vpop.f32.mrf.mxu0
        %v587 = vadd.f32 %v528, %v586
        %588 = vdwg.mxu0
        %v589 = vmax.f32 %v549, 0.0
        %v590 = vmax.f32 %v578, 0.0
        %v591 = vmax.f32 %v552, 0.0
        %v592 = vmax.f32 %v581, 0.0
        %v593 = vmax.f32 %v555, 0.0
        %v594 = vmax.f32 %v584, 0.0
        %v595 = vmax.f32 %v558, 0.0
        %v596 = vmax.f32 %v587, 0.0
        %v597 = vld [vmem:[#allocation10] sm:$0xff]
        %v598 = vld [vmem:[#allocation10 + $0x8] sm:$0xff]
        %v599 = vld [vmem:[#allocation10 + $0x10] sm:$0xff]
        %v600 = vld [vmem:[#allocation10 + $0x18] sm:$0xff]
        %v601 = vld [vmem:[#allocation10 + $0x20] sm:$0xff]
        %v602 = vld [vmem:[#allocation10 + $0x28] sm:$0xff]
        %v603 = vld [vmem:[#allocation10 + $0x30] sm:$0xff]
        %v604 = vld [vmem:[#allocation10 + $0x38] sm:$0xff]
        %v605 = vld [vmem:[#allocation10 + $0x40] sm:$0xff]
        %v606 = vld [vmem:[#allocation10 + $0x48] sm:$0xff]
        %v607 = vld [vmem:[#allocation10 + $0x50] sm:$0xff]
        %v608 = vld [vmem:[#allocation10 + $0x58] sm:$0xff]
        %v609 = vld [vmem:[#allocation10 + $0x60] sm:$0xff]
        %v610 = vld [vmem:[#allocation10 + $0x68] sm:$0xff]
        %v611 = vld [vmem:[#allocation10 + $0x70] sm:$0xff]
        %v612 = vld [vmem:[#allocation10 + $0x78] sm:$0xff]
        %v613 = vld [vmem:[#allocation10 + $0x80] sm:$0xff]
        %v614 = vld [vmem:[#allocation10 + $0x88] sm:$0xff]
        %v615 = vld [vmem:[#allocation10 + $0x90] sm:$0xff]
        %v616 = vld [vmem:[#allocation10 + $0x98] sm:$0xff]
        %v617 = vld [vmem:[#allocation10 + $0xa0] sm:$0xff]
        %v618 = vld [vmem:[#allocation10 + $0xa8] sm:$0xff]
        %v619 = vld [vmem:[#allocation10 + $0xb0] sm:$0xff]
        %v620 = vld [vmem:[#allocation10 + $0xb8] sm:$0xff]
        %v621 = vld [vmem:[#allocation10 + $0xc0] sm:$0xff]
        %v622 = vld [vmem:[#allocation10 + $0xc8] sm:$0xff]
        %v623 = vld [vmem:[#allocation10 + $0xd0] sm:$0xff]
        %v624 = vld [vmem:[#allocation10 + $0xd8] sm:$0xff]
        %v625 = vld [vmem:[#allocation10 + $0xe0] sm:$0xff]
        %v626 = vld [vmem:[#allocation10 + $0xe8] sm:$0xff]
        %v627 = vld [vmem:[#allocation10 + $0xf0] sm:$0xff]
        %v628 = vld [vmem:[#allocation10 + $0xf8] sm:$0xff]
        %v629 = vld [vmem:[#allocation10 + $0x100] sm:$0xff]
        %v630 = vld [vmem:[#allocation10 + $0x108] sm:$0xff]
        %v631 = vld [vmem:[#allocation10 + $0x110] sm:$0xff]
        %v632 = vld [vmem:[#allocation10 + $0x118] sm:$0xff]
        %v633 = vld [vmem:[#allocation10 + $0x120] sm:$0xff]
        %v634 = vld [vmem:[#allocation10 + $0x128] sm:$0xff]
        %v635 = vld [vmem:[#allocation10 + $0x130] sm:$0xff]
        %v636 = vld [vmem:[#allocation10 + $0x138] sm:$0xff]
        %v637 = vld [vmem:[#allocation10 + $0x140] sm:$0xff]
        %v638 = vld [vmem:[#allocation10 + $0x148] sm:$0xff]
        %v639 = vld [vmem:[#allocation10 + $0x150] sm:$0xff]
        %v640 = vld [vmem:[#allocation10 + $0x158] sm:$0xff]
        %v641 = vld [vmem:[#allocation10 + $0x160] sm:$0xff]
        %v642 = vld [vmem:[#allocation10 + $0x168] sm:$0xff]
        %v643 = vld [vmem:[#allocation10 + $0x170] sm:$0xff]
        %v644 = vld [vmem:[#allocation10 + $0x178] sm:$0xff]
        %v645 = vld [vmem:[#allocation10 + $0x180] sm:$0xff]
        %v646 = vld [vmem:[#allocation10 + $0x188] sm:$0xff]
        %v647 = vld [vmem:[#allocation10 + $0x190] sm:$0xff]
        %v648 = vld [vmem:[#allocation10 + $0x198] sm:$0xff]
        %v649 = vld [vmem:[#allocation10 + $0x1a0] sm:$0xff]
        %v650 = vld [vmem:[#allocation10 + $0x1a8] sm:$0xff]
        %v651 = vld [vmem:[#allocation10 + $0x1b0] sm:$0xff]
        %v652 = vld [vmem:[#allocation10 + $0x1b8] sm:$0xff]
        %v653 = vld [vmem:[#allocation10 + $0x1c0] sm:$0xff]
        %v654 = vld [vmem:[#allocation10 + $0x1c8] sm:$0xff]
        %v655 = vld [vmem:[#allocation10 + $0x1d0] sm:$0xff]
        %v656 = vld [vmem:[#allocation10 + $0x1d8] sm:$0xff]
        %v657 = vld [vmem:[#allocation10 + $0x1e0] sm:$0xff]
        %v658 = vld [vmem:[#allocation10 + $0x1e8] sm:$0xff]
        %v659 = vld [vmem:[#allocation10 + $0x1f0] sm:$0xff]
        %v660 = vld [vmem:[#allocation10 + $0x1f8] sm:$0xff]
        %v661 = vld [vmem:[#allocation10 + $0x200] sm:$0xff]
        %v662 = vld [vmem:[#allocation10 + $0x208] sm:$0xff]
        %v663 = vld [vmem:[#allocation10 + $0x210] sm:$0xff]
        %v664 = vld [vmem:[#allocation10 + $0x218] sm:$0xff]
        %v665 = vld [vmem:[#allocation10 + $0x220] sm:$0xff]
        %v666 = vld [vmem:[#allocation10 + $0x228] sm:$0xff]
        %v667 = vld [vmem:[#allocation10 + $0x230] sm:$0xff]
        %v668 = vld [vmem:[#allocation10 + $0x238] sm:$0xff]
        %v669 = vld [vmem:[#allocation10 + $0x240] sm:$0xff]
        %v670 = vld [vmem:[#allocation10 + $0x248] sm:$0xff]
        %v671 = vld [vmem:[#allocation10 + $0x250] sm:$0xff]
        %v672 = vld [vmem:[#allocation10 + $0x258] sm:$0xff]
        %v673 = vld [vmem:[#allocation10 + $0x260] sm:$0xff]
        %v674 = vld [vmem:[#allocation10 + $0x268] sm:$0xff]
        %v675 = vld [vmem:[#allocation10 + $0x270] sm:$0xff]
        %v676 = vld [vmem:[#allocation10 + $0x278] sm:$0xff]
        %v677 = vld [vmem:[#allocation10 + $0x280] sm:$0xff]
        %v678 = vld [vmem:[#allocation10 + $0x288] sm:$0xff]
        %v679 = vld [vmem:[#allocation10 + $0x290] sm:$0xff]
        %v680 = vld [vmem:[#allocation10 + $0x298] sm:$0xff]
        %v681 = vld [vmem:[#allocation10 + $0x2a0] sm:$0xff]
        %v682 = vld [vmem:[#allocation10 + $0x2a8] sm:$0xff]
        %v683 = vld [vmem:[#allocation10 + $0x2b0] sm:$0xff]
        %v684 = vld [vmem:[#allocation10 + $0x2b8] sm:$0xff]
        %v685 = vld [vmem:[#allocation10 + $0x2c0] sm:$0xff]
        %v686 = vld [vmem:[#allocation10 + $0x2c8] sm:$0xff]
        %v687 = vld [vmem:[#allocation10 + $0x2d0] sm:$0xff]
        %v688 = vld [vmem:[#allocation10 + $0x2d8] sm:$0xff]
        %v689 = vld [vmem:[#allocation10 + $0x2e0] sm:$0xff]
        %v690 = vld [vmem:[#allocation10 + $0x2e8] sm:$0xff]
        %v691 = vld [vmem:[#allocation10 + $0x2f0] sm:$0xff]
        %v692 = vld [vmem:[#allocation10 + $0x2f8] sm:$0xff]
        %v693 = vld [vmem:[%s6] sm:$0x7]
        %v695 = vperm.slane %v693, 0
        %v696 = vperm.slane %v693, 1
        %v697 = vperm.slane %v693, 2
        %701 = vmatpush.msra.mxu0 %v642
        %702 = vmatpush.msra.mxu0 %v639
        %703 = vmatpush.msra.mxu0 %v636
        %704 = vmatpush.msra.mxu0 %v633
        %705 = vmatpush.msra.mxu0 %v630
        %706 = vmatpush.msra.mxu0 %v627
        %707 = vmatpush.msra.mxu0 %v624
        %708 = vmatpush.msra.mxu0 %v621
        %709 = vmatpush.msra.mxu0 %v618
        %710 = vmatpush.msra.mxu0 %v615
        %711 = vmatpush.msra.mxu0 %v612
        %712 = vmatpush.msra.mxu0 %v609
        %713 = vmatpush.msra.mxu0 %v606
        %714 = vmatpush.msra.mxu0 %v603
        %715 = vmatpush.msra.mxu0 %v600
        %716 = vmatpush.msra.mxu0 %v597
        %717 = vmatmul.f32.gmra.mxu0 %v589
        %v718 = vpop.f32.mrf.mxu0
        %v719 = vadd.f32 %v695, %v718
        %720 = vmatmul.f32.gmra.mxu0 %v591
        %v721 = vpop.f32.mrf.mxu0
        %v722 = vadd.f32 %v695, %v721
        %723 = vmatmul.f32.gmra.mxu0 %v593
        %v724 = vpop.f32.mrf.mxu0
        %v725 = vadd.f32 %v695, %v724
        %726 = vmatmul.f32.gmra.mxu0 %v595
        %v727 = vpop.f32.mrf.mxu0
        %v728 = vadd.f32 %v695, %v727
        %729 = vdwg.mxu0
        %730 = vmatpush.msra.mxu0 %v690
        %731 = vmatpush.msra.mxu0 %v687
        %732 = vmatpush.msra.mxu0 %v684
        %733 = vmatpush.msra.mxu0 %v681
        %734 = vmatpush.msra.mxu0 %v678
        %735 = vmatpush.msra.mxu0 %v675
        %736 = vmatpush.msra.mxu0 %v672
        %737 = vmatpush.msra.mxu0 %v669
        %738 = vmatpush.msra.mxu0 %v666
        %739 = vmatpush.msra.mxu0 %v663
        %740 = vmatpush.msra.mxu0 %v660
        %741 = vmatpush.msra.mxu0 %v657
        %742 = vmatpush.msra.mxu0 %v654
        %743 = vmatpush.msra.mxu0 %v651
        %744 = vmatpush.msra.mxu0 %v648
        %745 = vmatpush.msra.mxu0 %v645
        %746 = vmatmul.f32.gmra.mxu0 %v590
        %v747 = vpop.f32.mrf.mxu0
        %v748 = vadd.f32 %v719, %v747
        %749 = vmatmul.f32.gmra.mxu0 %v592
        %v750 = vpop.f32.mrf.mxu0
        %v751 = vadd.f32 %v722, %v750
        %752 = vmatmul.f32.gmra.mxu0 %v594
        %v753 = vpop.f32.mrf.mxu0
        %v754 = vadd.f32 %v725, %v753
        %755 = vmatmul.f32.gmra.mxu0 %v596
        %v756 = vpop.f32.mrf.mxu0
        %v757 = vadd.f32 %v728, %v756
        %758 = vdwg.mxu0
        %759 = vmatpush.msra.mxu0 %v643
        %760 = vmatpush.msra.mxu0 %v640
        %761 = vmatpush.msra.mxu0 %v637
        %762 = vmatpush.msra.mxu0 %v634
        %763 = vmatpush.msra.mxu0 %v631
        %764 = vmatpush.msra.mxu0 %v628
        %765 = vmatpush.msra.mxu0 %v625
        %766 = vmatpush.msra.mxu0 %v622
        %767 = vmatpush.msra.mxu0 %v619
        %768 = vmatpush.msra.mxu0 %v616
        %769 = vmatpush.msra.mxu0 %v613
        %770 = vmatpush.msra.mxu0 %v610
        %771 = vmatpush.msra.mxu0 %v607
        %772 = vmatpush.msra.mxu0 %v604
        %773 = vmatpush.msra.mxu0 %v601
        %774 = vmatpush.msra.mxu0 %v598
        %775 = vmatmul.f32.gmra.mxu0 %v589
        %v776 = vpop.f32.mrf.mxu0
        %v777 = vadd.f32 %v696, %v776
        %778 = vmatmul.f32.gmra.mxu0 %v591
        %v779 = vpop.f32.mrf.mxu0
        %v780 = vadd.f32 %v696, %v779
        %781 = vmatmul.f32.gmra.mxu0 %v593
        %v782 = vpop.f32.mrf.mxu0
        %v783 = vadd.f32 %v696, %v782
        %784 = vmatmul.f32.gmra.mxu0 %v595
        %v785 = vpop.f32.mrf.mxu0
        %v786 = vadd.f32 %v696, %v785
        %787 = vdwg.mxu0
        %788 = vmatpush.msra.mxu0 %v691
        %789 = vmatpush.msra.mxu0 %v688
        %790 = vmatpush.msra.mxu0 %v685
        %791 = vmatpush.msra.mxu0 %v682
        %792 = vmatpush.msra.mxu0 %v679
        %793 = vmatpush.msra.mxu0 %v676
        %794 = vmatpush.msra.mxu0 %v673
        %795 = vmatpush.msra.mxu0 %v670
        %796 = vmatpush.msra.mxu0 %v667
        %797 = vmatpush.msra.mxu0 %v664
        %798 = vmatpush.msra.mxu0 %v661
        %799 = vmatpush.msra.mxu0 %v658
        %800 = vmatpush.msra.mxu0 %v655
        %801 = vmatpush.msra.mxu0 %v652
        %802 = vmatpush.msra.mxu0 %v649
        %803 = vmatpush.msra.mxu0 %v646
        %804 = vmatmul.f32.gmra.mxu0 %v590
        %v805 = vpop.f32.mrf.mxu0
        %v806 = vadd.f32 %v777, %v805
        %807 = vmatmul.f32.gmra.mxu0 %v592
        %v808 = vpop.f32.mrf.mxu0
        %v809 = vadd.f32 %v780, %v808
        %810 = vmatmul.f32.gmra.mxu0 %v594
        %v811 = vpop.f32.mrf.mxu0
        %v812 = vadd.f32 %v783, %v811
        %813 = vmatmul.f32.gmra.mxu0 %v596
        %v814 = vpop.f32.mrf.mxu0
        %v815 = vadd.f32 %v786, %v814
        %816 = vdwg.mxu0
        %817 = vmatpush.msra.mxu0 %v644
        %818 = vmatpush.msra.mxu0 %v641
        %819 = vmatpush.msra.mxu0 %v638
        %820 = vmatpush.msra.mxu0 %v635
        %821 = vmatpush.msra.mxu0 %v632
        %822 = vmatpush.msra.mxu0 %v629
        %823 = vmatpush.msra.mxu0 %v626
        %824 = vmatpush.msra.mxu0 %v623
        %825 = vmatpush.msra.mxu0 %v620
        %826 = vmatpush.msra.mxu0 %v617
        %827 = vmatpush.msra.mxu0 %v614
        %828 = vmatpush.msra.mxu0 %v611
        %829 = vmatpush.msra.mxu0 %v608
        %830 = vmatpush.msra.mxu0 %v605
        %831 = vmatpush.msra.mxu0 %v602
        %832 = vmatpush.msra.mxu0 %v599
        %833 = vmatmul.f32.gmra.mxu0 %v589
        %v834 = vpop.f32.mrf.mxu0
        %v835 = vadd.f32 %v697, %v834
        %836 = vmatmul.f32.gmra.mxu0 %v591
        %v837 = vpop.f32.mrf.mxu0
        %v838 = vadd.f32 %v697, %v837
        %839 = vmatmul.f32.gmra.mxu0 %v593
        %v840 = vpop.f32.mrf.mxu0
        %v841 = vadd.f32 %v697, %v840
        %842 = vmatmul.f32.gmra.mxu0 %v595
        %v843 = vpop.f32.mrf.mxu0
        %v844 = vadd.f32 %v697, %v843
        %845 = vdwg.mxu0
        %846 = vmatpush.msra.mxu0 %v692
        %847 = vmatpush.msra.mxu0 %v689
        %848 = vmatpush.msra.mxu0 %v686
        %849 = vmatpush.msra.mxu0 %v683
        %850 = vmatpush.msra.mxu0 %v680
        %851 = vmatpush.msra.mxu0 %v677
        %852 = vmatpush.msra.mxu0 %v674
        %853 = vmatpush.msra.mxu0 %v671
        %854 = vmatpush.msra.mxu0 %v668
        %855 = vmatpush.msra.mxu0 %v665
        %856 = vmatpush.msra.mxu0 %v662
        %857 = vmatpush.msra.mxu0 %v659
        %858 = vmatpush.msra.mxu0 %v656
        %859 = vmatpush.msra.mxu0 %v653
        %860 = vmatpush.msra.mxu0 %v650
        %861 = vmatpush.msra.mxu0 %v647
        %862 = vmatmul.f32.gmra.mxu0 %v590
        %v863 = vpop.f32.mrf.mxu0
        %v864 = vadd.f32 %v835, %v863
        %865 = vmatmul.f32.gmra.mxu0 %v592
        %v866 = vpop.f32.mrf.mxu0
        %v867 = vadd.f32 %v838, %v866
        %868 = vmatmul.f32.gmra.mxu0 %v594
        %v869 = vpop.f32.mrf.mxu0
        %v870 = vadd.f32 %v841, %v869
        %871 = vmatmul.f32.gmra.mxu0 %v596
        %v872 = vpop.f32.mrf.mxu0
        %v873 = vadd.f32 %v844, %v872
        %874 = vdwg.mxu0
        %v875 = vmax.f32 %v748, 0.0
        %v876 = vmax.f32 %v806, 0.0
        %v877 = vmax.f32 %v864, 0.0
        %v878 = vmax.f32 %v751, 0.0
        %v879 = vmax.f32 %v809, 0.0
        %v880 = vmax.f32 %v867, 0.0
        %v881 = vmax.f32 %v754, 0.0
        %v882 = vmax.f32 %v812, 0.0
        %v883 = vmax.f32 %v870, 0.0
        %v884 = vmax.f32 %v757, 0.0
        %v885 = vmax.f32 %v815, 0.0
        %v886 = vmax.f32 %v873, 0.0
        %v887 = vld [vmem:[#allocation11] sm:$0xff]
        %v888 = vld [vmem:[#allocation11 + $0x8] sm:$0xff]
        %v889 = vld [vmem:[#allocation11 + $0x10] sm:$0xff]
        %v890 = vld [vmem:[#allocation11 + $0x18] sm:$0xff]
        %v891 = vld [vmem:[#allocation11 + $0x20] sm:$0xff]
        %v892 = vld [vmem:[#allocation11 + $0x28] sm:$0xff]
        %v893 = vld [vmem:[#allocation11 + $0x30] sm:$0xff]
        %v894 = vld [vmem:[#allocation11 + $0x38] sm:$0xff]
        %v895 = vld [vmem:[#allocation11 + $0x40] sm:$0xff]
        %v896 = vld [vmem:[#allocation11 + $0x48] sm:$0xff]
        %v897 = vld [vmem:[#allocation11 + $0x50] sm:$0xff]
        %v898 = vld [vmem:[#allocation11 + $0x58] sm:$0xff]
        %v899 = vld [vmem:[#allocation11 + $0x60] sm:$0xff]
        %v900 = vld [vmem:[#allocation11 + $0x68] sm:$0xff]
        %v901 = vld [vmem:[#allocation11 + $0x70] sm:$0xff]
        %v902 = vld [vmem:[#allocation11 + $0x78] sm:$0xff]
        %v903 = vld [vmem:[#allocation11 + $0x80] sm:$0xff]
        %v904 = vld [vmem:[#allocation11 + $0x88] sm:$0xff]
        %v905 = vld [vmem:[#allocation11 + $0x90] sm:$0xff]
        %v906 = vld [vmem:[#allocation11 + $0x98] sm:$0xff]
        %v907 = vld [vmem:[#allocation11 + $0xa0] sm:$0xff]
        %v908 = vld [vmem:[#allocation11 + $0xa8] sm:$0xff]
        %v909 = vld [vmem:[#allocation11 + $0xb0] sm:$0xff]
        %v910 = vld [vmem:[#allocation11 + $0xb8] sm:$0xff]
        %v911 = vld [vmem:[#allocation11 + $0xc0] sm:$0xff]
        %v912 = vld [vmem:[#allocation11 + $0xc8] sm:$0xff]
        %v913 = vld [vmem:[#allocation11 + $0xd0] sm:$0xff]
        %v914 = vld [vmem:[#allocation11 + $0xd8] sm:$0xff]
        %v915 = vld [vmem:[#allocation11 + $0xe0] sm:$0xff]
        %v916 = vld [vmem:[#allocation11 + $0xe8] sm:$0xff]
        %v917 = vld [vmem:[#allocation11 + $0xf0] sm:$0xff]
        %v918 = vld [vmem:[#allocation11 + $0xf8] sm:$0xff]
        %v919 = vld [vmem:[#allocation11 + $0x100] sm:$0xff]
        %v920 = vld [vmem:[#allocation11 + $0x108] sm:$0xff]
        %v921 = vld [vmem:[#allocation11 + $0x110] sm:$0xff]
        %v922 = vld [vmem:[#allocation11 + $0x118] sm:$0xff]
        %v923 = vld [vmem:[#allocation11 + $0x120] sm:$0xff]
        %v924 = vld [vmem:[#allocation11 + $0x128] sm:$0xff]
        %v925 = vld [vmem:[#allocation11 + $0x130] sm:$0xff]
        %v926 = vld [vmem:[#allocation11 + $0x138] sm:$0xff]
        %v927 = vld [vmem:[#allocation11 + $0x140] sm:$0xff]
        %v928 = vld [vmem:[#allocation11 + $0x148] sm:$0xff]
        %v929 = vld [vmem:[#allocation11 + $0x150] sm:$0xff]
        %v930 = vld [vmem:[#allocation11 + $0x158] sm:$0xff]
        %v931 = vld [vmem:[#allocation11 + $0x160] sm:$0xff]
        %v932 = vld [vmem:[#allocation11 + $0x168] sm:$0xff]
        %v933 = vld [vmem:[#allocation11 + $0x170] sm:$0xff]
        %v934 = vld [vmem:[#allocation11 + $0x178] sm:$0xff]
        %v935 = vld [vmem:[%s8] sm:$0x1]
        %v937 = vperm.slane %v935, 0
        %939 = vmatpush.msra.mxu0 %v902
        %940 = vmatpush.msra.mxu0 %v901
        %941 = vmatpush.msra.mxu0 %v900
        %942 = vmatpush.msra.mxu0 %v899
        %943 = vmatpush.msra.mxu0 %v898
        %944 = vmatpush.msra.mxu0 %v897
        %945 = vmatpush.msra.mxu0 %v896
        %946 = vmatpush.msra.mxu0 %v895
        %947 = vmatpush.msra.mxu0 %v894
        %948 = vmatpush.msra.mxu0 %v893
        %949 = vmatpush.msra.mxu0 %v892
        %950 = vmatpush.msra.mxu0 %v891
        %951 = vmatpush.msra.mxu0 %v890
        %952 = vmatpush.msra.mxu0 %v889
        %953 = vmatpush.msra.mxu0 %v888
        %954 = vmatpush.msra.mxu0 %v887
        %955 = vmatmul.f32.gmra.mxu0 %v875
        %v956 = vpop.f32.mrf.mxu0
        %v957 = vadd.f32 %v937, %v956
        %958 = vmatmul.f32.gmra.mxu0 %v878
        %v959 = vpop.f32.mrf.mxu0
        %v960 = vadd.f32 %v937, %v959
        %961 = vmatmul.f32.gmra.mxu0 %v881
        %v962 = vpop.f32.mrf.mxu0
        %v963 = vadd.f32 %v937, %v962
        %964 = vmatmul.f32.gmra.mxu0 %v884
        %v965 = vpop.f32.mrf.mxu0
        %v966 = vadd.f32 %v937, %v965
        %967 = vdwg.mxu0
        %968 = vmatpush.msra.mxu0 %v918
        %969 = vmatpush.msra.mxu0 %v917
        %970 = vmatpush.msra.mxu0 %v916
        %971 = vmatpush.msra.mxu0 %v915
        %972 = vmatpush.msra.mxu0 %v914
        %973 = vmatpush.msra.mxu0 %v913
        %974 = vmatpush.msra.mxu0 %v912
        %975 = vmatpush.msra.mxu0 %v911
        %976 = vmatpush.msra.mxu0 %v910
        %977 = vmatpush.msra.mxu0 %v909
        %978 = vmatpush.msra.mxu0 %v908
        %979 = vmatpush.msra.mxu0 %v907
        %980 = vmatpush.msra.mxu0 %v906
        %981 = vmatpush.msra.mxu0 %v905
        %982 = vmatpush.msra.mxu0 %v904
        %983 = vmatpush.msra.mxu0 %v903
        %984 = vmatmul.f32.gmra.mxu0 %v876
        %v985 = vpop.f32.mrf.mxu0
        %v986 = vadd.f32 %v957, %v985
        %987 = vmatmul.f32.gmra.mxu0 %v879
        %v988 = vpop.f32.mrf.mxu0
        %v989 = vadd.f32 %v960, %v988
        %990 = vmatmul.f32.gmra.mxu0 %v882
        %v991 = vpop.f32.mrf.mxu0
        %v992 = vadd.f32 %v963, %v991
        %993 = vmatmul.f32.gmra.mxu0 %v885
        %v994 = vpop.f32.mrf.mxu0
        %v995 = vadd.f32 %v966, %v994
        %996 = vdwg.mxu0
        %997 = vmatpush.msra.mxu0 %v934
        %998 = vmatpush.msra.mxu0 %v933
        %999 = vmatpush.msra.mxu0 %v932
        %1000 = vmatpush.msra.mxu0 %v931
        %1001 = vmatpush.msra.mxu0 %v930
        %1002 = vmatpush.msra.mxu0 %v929
        %1003 = vmatpush.msra.mxu0 %v928
        %1004 = vmatpush.msra.mxu0 %v927
        %1005 = vmatpush.msra.mxu0 %v926
        %1006 = vmatpush.msra.mxu0 %v925
        %1007 = vmatpush.msra.mxu0 %v924
        %1008 = vmatpush.msra.mxu0 %v923
        %1009 = vmatpush.msra.mxu0 %v922
        %1010 = vmatpush.msra.mxu0 %v921
        %1011 = vmatpush.msra.mxu0 %v920
        %1012 = vmatpush.msra.mxu0 %v919
        %1013 = vmatmul.f32.gmra.mxu0 %v877
        %v1014 = vpop.f32.mrf.mxu0
        %v1015 = vadd.f32 %v986, %v1014
        %1016 = vmatmul.f32.gmra.mxu0 %v880
        %v1017 = vpop.f32.mrf.mxu0
        %v1018 = vadd.f32 %v989, %v1017
        %1019 = vmatmul.f32.gmra.mxu0 %v883
        %v1020 = vpop.f32.mrf.mxu0
        %v1021 = vadd.f32 %v992, %v1020
        %1022 = vmatmul.f32.gmra.mxu0 %v886
        %v1023 = vpop.f32.mrf.mxu0
        %v1024 = vadd.f32 %v995, %v1023
        %1025 = vdwg.mxu0
        %1026 = vst [vmem:[%s433] sm:$0xff] %v1015
        %1027 = vst [vmem:[%s433 + $0x8] sm:$0xff] %v1018
        %1028 = vst [vmem:[%s433 + $0x10] sm:$0xff] %v1021
        %1029 = vst [vmem:[%s433 + $0x18] sm:$0xff] %v1024
        %s1030 = sand.u32 %s231, 1
        %s1031 = scalar_lea.sflag [#allocation4], %s1030
        %s1032 = sand.u32 %s231, 1
        %s1033 = smul.addr %s1032, 32
        %s1034 = scalar_lea.vmem [#allocation13], %s1033
        // Predicated region
        $region81: #{tpu_custom_call.1} parent=55 // pred_check
          %p1035 = pneg %p241
        $region82: #{tpu_custom_call.1} parent=55 // pred_check_branch
          %1037 = sbr.rel (%p1035) target = $region84
        $region83: #{tpu_custom_call.1} parent=55 // pred_region
          %s1038 = smul.u32 4, %s29
          %1040 = vsyncadd %s1031, 0
          %s1041 = smul.addr %s1038, 8
          %s1042 = scalar_lea.hbm %s9, %s1041
          %s1043 = sshll.u32 %s1034, 4
          %s1044 = int_to_ptr.vmem [resolvable:$true] %s1043
          %s1045 = sshll.u32 %s1042, 4
          %s1046 = int_to_ptr.hbm [resolvable:$true] %s1045
          %1051 = dma.vmem_to_hbm [thread:$0]  %s1044, 512, %s1046, %s1031, 128, 128, 8
        $region84: #{tpu_custom_call.1} parent=55 // pred_fallthru
          _
      $region56: #{tpu_custom_call.1} parent=5 // pred_fallthru
        _
      %p1052 = scmp.le.s32.totalorder 2, %s24
      // Predicated region
      $region85: #{tpu_custom_call.1} parent=5 // pred_check
        %p1053 = pneg %p1052
      $region86: #{tpu_custom_call.1} parent=5 // pred_check_branch
        %1055 = sbr.rel (%p1053) target = $region88
      $region87: #{tpu_custom_call.1} parent=5 // pred_region
        %s1056 = ssub.s32 %s24, 2
        // Predicated region
        $region89: #{tpu_custom_call.1} parent=87 // pred_check
          %p1057 = pneg %p247
        $region90: #{tpu_custom_call.1} parent=87 // pred_check_branch
          %1059 = sbr.rel (%p1057) target = $region92
        $region91: #{tpu_custom_call.1} parent=87 // pred_region
          %s1060 = sand.u32 %s232, 1
          %s1061 = scalar_lea.sflag [#allocation4], %s1060
          %s1062 = sand.u32 %s232, 1
          %s1063 = smul.addr %s1062, 32
          %s1064 = scalar_lea.vmem [#allocation13], %s1063
          %1066 = dma.done %s1061, 512
        $region92: #{tpu_custom_call.1} parent=87 // pred_fallthru
          _
      $region88: #{tpu_custom_call.1} parent=5 // pred_fallthru
        _
    $region6: #{tpu_custom_call.1} parent=1 // loop_footer
      %s28 = sadd.s32 1, %s24
    $region7: #{tpu_custom_call.1} parent=1 // loop_footer_branch
      %23 = sbr.rel target = $region3
    $region8: #{tpu_custom_call.1} parent=1 // loop_exit
      _
    %1067 = vsyncpa [#allocation3], 1
    %s1068 = scalar_lea.sflag [#allocation3], 1
    %1069 = vsyncpa %s1068, 1
    %1070 = vsyncpa [#allocation6], 1
    %1071 = vsyncpa [#allocation9], 1
    %1072 = vsyncpa [#allocation12], 1
    %1073 = vsyncpa [#allocation4], 1
    %s1074 = scalar_lea.sflag [#allocation4], 1
    %1075 = vsyncpa %s1074, 1

// kernel: tpu_custom_call.1
$region0: #{tpu_custom_call.1}
  #allocation0 [shape = 'u32[]', space=smem, size = 0x4, offset = 0x4, fixed_abs, tag = 'smem constant byte address 0x4 - core index']
  #allocation1 [shape = 'u32[72,128]{1,0:T(1,128)}', space=vmem, size = 0x9000, scoped, tag = 'internal scratch']
  %s0 = inlined_call_operand.hbm [shape: f32[64,128], index: 0, kind: input, shape index: {}]
  %s1 = inlined_call_operand.hbm [shape: f32[128,128], index: 1, kind: input, shape index: {}]
  %s2 = inlined_call_operand.hbm [shape: f32[1,128], index: 2, kind: input, shape index: {}]
  %s3 = inlined_call_operand.hbm [shape: f32[128,256], index: 3, kind: input, shape index: {}]
  %s4 = inlined_call_operand.vmem [shape: f32[1,256], index: 4, kind: input, shape index: {}]
  %s5 = inlined_call_operand.hbm [shape: f32[256,384], index: 5, kind: input, shape index: {}]
  %s6 = inlined_call_operand.vmem [shape: f32[1,384], index: 6, kind: input, shape index: {}]
  %s7 = inlined_call_operand.hbm [shape: f32[384,128], index: 7, kind: input, shape index: {}]
  %s8 = inlined_call_operand.vmem [shape: f32[1,128], index: 8, kind: input, shape index: {}]
  %s9 = inlined_call_operand.hbm [shape: f32[64,128], index: 9, kind: output, shape index: {}]
  %s10 = sld [smem:[#allocation0]]
  $region93: #{tpu_custom_call.1} parent=0
    _
  %s12 = ssub.s32 1, %s10
  %s13 = scalar_select 0, %s12, %s10
  $region1: #{tpu_custom_call.1} parent=0
    #allocation2 [shape = 'u8[32768]{0}', space=vmem, size = 0x8000, scoped, tag = 'input window, operand 0']
    #allocation3 [shape = 's32[2]{0}', space=sflag, size = 0x8, scoped, tag = 'scoped memory for tpu_custom_call.1']
    #allocation4 [shape = 's32[2]{0}', space=sflag, size = 0x8, scoped, tag = 'scoped memory for tpu_custom_call.1']
    #allocation5 [shape = 'u8[65536]{0}', space=vmem, size = 0x10000, scoped, tag = 'input window, operand 1, single buffered']
    #allocation6 [shape = 's32[1]{0}', space=sflag, size = 0x4, scoped, tag = 'scoped memory for tpu_custom_call.1']
    #allocation7 [shape = 'u8[512]{0}', space=vmem, size = 0x400, scoped, tag = 'input window, operand 2, single buffered']
    #allocation8 [shape = 'u8[131072]{0}', space=vmem, size = 0x20000, scoped, tag = 'input window, operand 3, single buffered']
    #allocation9 [shape = 's32[1]{0}', space=sflag, size = 0x4, scoped, tag = 'scoped memory for tpu_custom_call.1']
    #allocation10 [shape = 'u8[393216]{0}', space=vmem, size = 0x60000, scoped, tag = 'input window, operand 5, single buffered']
    #allocation11 [shape = 'u8[196608]{0}', space=vmem, size = 0x30000, scoped, tag = 'input window, operand 7, single buffered']
    #allocation12 [shape = 's32[1]{0}', space=sflag, size = 0x4, scoped, tag = 'scoped memory for tpu_custom_call.1']
    #allocation13 [shape = 'u8[32768]{0}', space=vmem, size = 0x8000, scoped, tag = 'output window, operand 0']
    %14 = vsyncpa [#allocation3], 0
    %s15 = scalar_lea.sflag [#allocation3], 1
    %16 = vsyncpa %s15, 0
    %17 = vsyncpa [#allocation6], 0
    %18 = vsyncpa [#allocation9], 0
    %19 = vsyncpa [#allocation12], 0
    %20 = vsyncpa [#allocation4], 0
    %s21 = scalar_lea.sflag [#allocation4], 1
    %22 = vsyncpa %s21, 0
    loop: start=0, step=1, limit=4
    $region2: #{tpu_custom_call.1} parent=1 // loop_pre_header
      _
    $region3: #{tpu_custom_call.1} parent=1 // loop_header
      %s24 = sphi 0, %s28
      %p25 = scmp.ge.s32.totalorder %s24, 4
      %s34 = sphi 0, %s36
      %s37 = sphi 0, %s34
      %s38 = sphi 0, %s37
      %s54 = sphi 0, %s38
      %s58 = sphi 0, %s58
      %s60 = sphi 0, %s58
      %s61 = sphi 0, %s60
      %s75 = sphi 0, %s61
      %s79 = sphi 0, %s79
      %s81 = sphi 0, %s79
      %s82 = sphi 0, %s81
      %s96 = sphi 0, %s82
      %s100 = sphi 0, %s100
      %s102 = sphi 0, %s100
      %s103 = sphi 0, %s102
      %s117 = sphi 0, %s103
      %s121 = sphi 0, %s121
      %s123 = sphi 0, %s121
      %s124 = sphi 0, %s123
      %s138 = sphi 0, %s124
      %s142 = sphi 0, %s142
      %s144 = sphi 0, %s142
      %s145 = sphi 0, %s144
      %s159 = sphi 0, %s145
      %s163 = sphi 0, %s163
      %s165 = sphi 0, %s163
      %s166 = sphi 0, %s165
      %s180 = sphi 0, %s166
      %s184 = sphi 0, %s184
      %s186 = sphi 0, %s184
      %s187 = sphi 0, %s186
      %s201 = sphi 0, %s187
      %s205 = sphi 0, %s205
      %s207 = sphi 0, %s205
      %s208 = sphi 0, %s207
      %s222 = sphi 0, %s208
      %s228 = sphi 0, %s230
      %s231 = sphi 0, %s228
      %s232 = sphi 0, %s231
      %s248 = sphi 0, %s232
    $region4: #{tpu_custom_call.1} parent=1 // loop_header_branch
      %27 = sbr.rel (%p25) target = $region8
    $region5: #{tpu_custom_call.1} parent=1 // loop_body
      %s29 = ssub.s32 %s24, 1
      %s30 = ssub.s32 %s24, 2
      %s31 = sadd.s32 %s24, 1
      %s32 = ssub.s32 %s24, %s31
      %p33 = scmp.eq.s32.totalorder %s32, 0
      %s35 = sadd.s32 %s34, 1
      %s36 = scalar_select %p33, %s34, %s35
      %p39 = pneg %p33
      %p40 = scmp.eq.s32.totalorder %s24, 1
      %p41 = por %p39, %p40
      %p42 = scmp.ne.s32.totalorder %s34, %s37
      %p43 = scmp.eq.s32.totalorder %s24, 0
      %p44 = por %p42, %p43
      %p45 = scmp.ne.s32.totalorder %s34, %s37
      %p46 = scmp.eq.s32.totalorder %s29, 1
      %p47 = por %p45, %p46
      %p48 = scmp.ne.s32.totalorder %s37, %s38
      %p49 = scmp.eq.s32.totalorder %s29, 0
      %p50 = por %p48, %p49
      %p51 = scmp.ne.s32.totalorder %s37, %s38
      %p52 = scmp.eq.s32.totalorder %s30, 1
      %p53 = por %p51, %p52
      %p55 = scmp.ne.s32.totalorder %s38, %s54
      %p56 = scmp.eq.s32.totalorder %s30, 0
      %p57 = por %p55, %p56
      %s59 = sadd.s32 %s58, 1
      %p62 = scmp.eq.s32.totalorder %s24, 1
      %p63 = scmp.ne.s32.totalorder %s58, %s60
      %p64 = scmp.eq.s32.totalorder %s24, 0
      %p65 = por %p63, %p64
      %p66 = scmp.ne.s32.totalorder %s58, %s60
      %p67 = scmp.eq.s32.totalorder %s29, 1
      %p68 = por %p66, %p67
      %p69 = scmp.ne.s32.totalorder %s60, %s61
      %p70 = scmp.eq.s32.totalorder %s29, 0
      %p71 = por %p69, %p70
      %p72 = scmp.ne.s32.totalorder %s60, %s61
      %p73 = scmp.eq.s32.totalorder %s30, 1
      %p74 = por %p72, %p73
      %p76 = scmp.ne.s32.totalorder %s61, %s75
      %p77 = scmp.eq.s32.totalorder %s30, 0
      %p78 = por %p76, %p77
      %s80 = sadd.s32 %s79, 1
      %p83 = scmp.eq.s32.totalorder %s24, 1
      %p84 = scmp.ne.s32.totalorder %s79, %s81
      %p85 = scmp.eq.s32.totalorder %s24, 0
      %p86 = por %p84, %p85
      %p87 = scmp.ne.s32.totalorder %s79, %s81
      %p88 = scmp.eq.s32.totalorder %s29, 1
      %p89 = por %p87, %p88
      %p90 = scmp.ne.s32.totalorder %s81, %s82
      %p91 = scmp.eq.s32.totalorder %s29, 0
      %p92 = por %p90, %p91
      %p93 = scmp.ne.s32.totalorder %s81, %s82
      %p94 = scmp.eq.s32.totalorder %s30, 1
      %p95 = por %p93, %p94
      %p97 = scmp.ne.s32.totalorder %s82, %s96
      %p98 = scmp.eq.s32.totalorder %s30, 0
      %p99 = por %p97, %p98
      %s101 = sadd.s32 %s100, 1
      %p104 = scmp.eq.s32.totalorder %s24, 1
      %p105 = scmp.ne.s32.totalorder %s100, %s102
      %p106 = scmp.eq.s32.totalorder %s24, 0
      %p107 = por %p105, %p106
      %p108 = scmp.ne.s32.totalorder %s100, %s102
      %p109 = scmp.eq.s32.totalorder %s29, 1
      %p110 = por %p108, %p109
      %p111 = scmp.ne.s32.totalorder %s102, %s103
      %p112 = scmp.eq.s32.totalorder %s29, 0
      %p113 = por %p111, %p112
      %p114 = scmp.ne.s32.totalorder %s102, %s103
      %p115 = scmp.eq.s32.totalorder %s30, 1
      %p116 = por %p114, %p115
      %p118 = scmp.ne.s32.totalorder %s103, %s117
      %p119 = scmp.eq.s32.totalorder %s30, 0
      %p120 = por %p118, %p119
      %s122 = sadd.s32 %s121, 1
      %p125 = scmp.eq.s32.totalorder %s24, 1
      %p126 = scmp.ne.s32.totalorder %s121, %s123
      %p127 = scmp.eq.s32.totalorder %s24, 0
      %p128 = por %p126, %p127
      %p129 = scmp.ne.s32.totalorder %s121, %s123
      %p130 = scmp.eq.s32.totalorder %s29, 1
      %p131 = por %p129, %p130
      %p132 = scmp.ne.s32.totalorder %s123, %s124
      %p133 = scmp.eq.s32.totalorder %s29, 0
      %p134 = por %p132, %p133
      %p135 = scmp.ne.s32.totalorder %s123, %s124
      %p136 = scmp.eq.s32.totalorder %s30, 1
      %p137 = por %p135, %p136
      %p139 = scmp.ne.s32.totalorder %s124, %s138
      %p140 = scmp.eq.s32.totalorder %s30, 0
      %p141 = por %p139, %p140
      %s143 = sadd.s32 %s142, 1
      %p146 = scmp.eq.s32.totalorder %s24, 1
      %p147 = scmp.ne.s32.totalorder %s142, %s144
      %p148 = scmp.eq.s32.totalorder %s24, 0
      %p149 = por %p147, %p148
      %p150 = scmp.ne.s32.totalorder %s142, %s144
      %p151 = scmp.eq.s32.totalorder %s29, 1
      %p152 = por %p150, %p151
      %p153 = scmp.ne.s32.totalorder %s144, %s145
      %p154 = scmp.eq.s32.totalorder %s29, 0
      %p155 = por %p153, %p154
      %p156 = scmp.ne.s32.totalorder %s144, %s145
      %p157 = scmp.eq.s32.totalorder %s30, 1
      %p158 = por %p156, %p157
      %p160 = scmp.ne.s32.totalorder %s145, %s159
      %p161 = scmp.eq.s32.totalorder %s30, 0
      %p162 = por %p160, %p161
      %s164 = sadd.s32 %s163, 1
      %p167 = scmp.eq.s32.totalorder %s24, 1
      %p168 = scmp.ne.s32.totalorder %s163, %s165
      %p169 = scmp.eq.s32.totalorder %s24, 0
      %p170 = por %p168, %p169
      %p171 = scmp.ne.s32.totalorder %s163, %s165
      %p172 = scmp.eq.s32.totalorder %s29, 1
      %p173 = por %p171, %p172
      %p174 = scmp.ne.s32.totalorder %s165, %s166
      %p175 = scmp.eq.s32.totalorder %s29, 0
      %p176 = por %p174, %p175
      %p177 = scmp.ne.s32.totalorder %s165, %s166
      %p178 = scmp.eq.s32.totalorder %s30, 1
      %p179 = por %p177, %p178
      %p181 = scmp.ne.s32.totalorder %s166, %s180
      %p182 = scmp.eq.s32.totalorder %s30, 0
      %p183 = por %p181, %p182
      %s185 = sadd.s32 %s184, 1
      %p188 = scmp.eq.s32.totalorder %s24, 1
      %p189 = scmp.ne.s32.totalorder %s184, %s186
      %p190 = scmp.eq.s32.totalorder %s24, 0
      %p191 = por %p189, %p190
      %p192 = scmp.ne.s32.totalorder %s184, %s186
      %p193 = scmp.eq.s32.totalorder %s29, 1
      %p194 = por %p192, %p193
      %p195 = scmp.ne.s32.totalorder %s186, %s187
      %p196 = scmp.eq.s32.totalorder %s29, 0
      %p197 = por %p195, %p196
      %p198 = scmp.ne.s32.totalorder %s186, %s187
      %p199 = scmp.eq.s32.totalorder %s30, 1
      %p200 = por %p198, %p199
      %p202 = scmp.ne.s32.totalorder %s187, %s201
      %p203 = scmp.eq.s32.totalorder %s30, 0
      %p204 = por %p202, %p203
      %s206 = sadd.s32 %s205, 1
      %p209 = scmp.eq.s32.totalorder %s24, 1
      %p210 = scmp.ne.s32.totalorder %s205, %s207
      %p211 = scmp.eq.s32.totalorder %s24, 0
      %p212 = por %p210, %p211
      %p213 = scmp.ne.s32.totalorder %s205, %s207
      %p214 = scmp.eq.s32.totalorder %s29, 1
      %p215 = por %p213, %p214
      %p216 = scmp.ne.s32.totalorder %s207, %s208
      %p217 = scmp.eq.s32.totalorder %s29, 0
      %p218 = por %p216, %p217
      %p219 = scmp.ne.s32.totalorder %s207, %s208
      %p220 = scmp.eq.s32.totalorder %s30, 1
      %p221 = por %p219, %p220
      %p223 = scmp.ne.s32.totalorder %s208, %s222
      %p224 = scmp.eq.s32.totalorder %s30, 0
      %p225 = por %p223, %p224
      %s226 = ssub.s32 %s24, %s31
      %p227 = scmp.eq.s32.totalorder %s226, 0
      %s229 = sadd.s32 %s228, 1
      %s230 = scalar_select %p227, %s228, %s229
      %p233 = pneg %p227
      %p234 = scmp.eq.s32.totalorder %s24, 1
      %p235 = por %p233, %p234
      %p236 = scmp.ne.s32.totalorder %s228, %s231
      %p237 = scmp.eq.s32.totalorder %s24, 0
      %p238 = por %p236, %p237
      %p239 = scmp.ne.s32.totalorder %s228, %s231
      %p240 = scmp.eq.s32.totalorder %s29, 1
      %p241 = por %p239, %p240
      %p242 = scmp.ne.s32.totalorder %s231, %s232
      %p243 = scmp.eq.s32.totalorder %s29, 0
      %p244 = por %p242, %p243
      %p245 = scmp.ne.s32.totalorder %s231, %s232
      %p246 = scmp.eq.s32.totalorder %s30, 1
      %p247 = por %p245, %p246
      %p249 = scmp.ne.s32.totalorder %s232, %s248
      %p250 = scmp.eq.s32.totalorder %s30, 0
      %p251 = por %p249, %p250
      %p252 = scmp.le.s32.totalorder 1, %s24
      %p253 = scmp.lt.s32.totalorder %s24, 3
      %p254 = pnand %p252, %p253
      %p255 = pneg %p254
      // Predicated region
      $region9: #{tpu_custom_call.1} parent=5 // pred_check
        _
      $region10: #{tpu_custom_call.1} parent=5 // pred_check_branch
        %257 = sbr.rel (%p254) target = $region12
      $region11: #{tpu_custom_call.1} parent=5 // pred_region
        %s258 = ssub.s32 %s24, 1
        // Predicated region
        $region13: #{tpu_custom_call.1} parent=11 // pred_check
          %p259 = pneg %p71
        $region14: #{tpu_custom_call.1} parent=11 // pred_check_branch
          %261 = sbr.rel (%p259) target = $region16
        $region15: #{tpu_custom_call.1} parent=11 // pred_region
          %263 = vsyncadd [#allocation6], 0
          %s264 = sshll.u32 %s1, 4
          %s265 = int_to_ptr.hbm [resolvable:$true] %s264
          %s266 = sshll.u32 [#allocation5], 4
          %s267 = int_to_ptr.vmem [resolvable:$true] %s266
          %272 = dma.hbm_to_vmem [thread:$0]  %s265, 2048, %s267, [#allocation6], 128, 128, 8
        $region16: #{tpu_custom_call.1} parent=11 // pred_fallthru
          _
        // Predicated region
        $region17: #{tpu_custom_call.1} parent=11 // pred_check
          %p273 = pneg %p92
        $region18: #{tpu_custom_call.1} parent=11 // pred_check_branch
          %275 = sbr.rel (%p273) target = $region20
        $region19: #{tpu_custom_call.1} parent=11 // pred_region
          %277 = vsyncadd [#allocation6], 0
          %s279 = sshll.u32 %s2, 4
          %s280 = int_to_ptr.hbm [resolvable:$true] %s279
          %s281 = sshll.u32 [#allocation7], 4
          %s282 = int_to_ptr.vmem [resolvable:$true] %s281
          %284 = dma.hbm_to_vmem [thread:$0]  %s280, 16, %s282, [#allocation6]
        $region20: #{tpu_custom_call.1} parent=11 // pred_fallthru
          _
        // Predicated region
        $region21: #{tpu_custom_call.1} parent=11 // pred_check
          %p285 = pneg %p113
        $region22: #{tpu_custom_call.1} parent=11 // pred_check_branch
          %287 = sbr.rel (%p285) target = $region24
        $region23: #{tpu_custom_call.1} parent=11 // pred_region
          %289 = vsyncadd [#allocation9], 0
          %s290 = sshll.u32 %s3, 4
          %s291 = int_to_ptr.hbm [resolvable:$true] %s290
          %s292 = sshll.u32 [#allocation8], 4
          %s293 = int_to_ptr.vmem [resolvable:$true] %s292
          %298 = dma.hbm_to_vmem [thread:$0]  %s291, 4096, %s293, [#allocation9], 256, 256, 16
        $region24: #{tpu_custom_call.1} parent=11 // pred_fallthru
          _
        // Predicated region
        $region25: #{tpu_custom_call.1} parent=11 // pred_check
          %p299 = pneg %p134
        $region26: #{tpu_custom_call.1} parent=11 // pred_check_branch
          %301 = sbr.rel (%p299) target = $region28
        $region27: #{tpu_custom_call.1} parent=11 // pred_region
          _
        $region28: #{tpu_custom_call.1} parent=11 // pred_fallthru
          _
        // Predicated region
        $region29: #{tpu_custom_call.1} parent=11 // pred_check
          %p302 = pneg %p155
        $region30: #{tpu_custom_call.1} parent=11 // pred_check_branch
          %304 = sbr.rel (%p302) target = $region32
        $region31: #{tpu_custom_call.1} parent=11 // pred_region
          %306 = vsyncadd [#allocation9], 0
          %s307 = sshll.u32 %s5, 4
          %s308 = int_to_ptr.hbm [resolvable:$true] %s307
          %s309 = sshll.u32 [#allocation10], 4
          %s310 = int_to_ptr.vmem [resolvable:$true] %s309
          %315 = dma.hbm_to_vmem [thread:$0]  %s308, 12288, %s310, [#allocation9], 384, 384, 24
        $region32: #{tpu_custom_call.1} parent=11 // pred_fallthru
          _
        // Predicated region
        $region33: #{tpu_custom_call.1} parent=11 // pred_check
          %p316 = pneg %p176
        $region34: #{tpu_custom_call.1} parent=11 // pred_check_branch
          %318 = sbr.rel (%p316) target = $region36
        $region35: #{tpu_custom_call.1} parent=11 // pred_region
          _
        $region36: #{tpu_custom_call.1} parent=11 // pred_fallthru
          _
        // Predicated region
        $region37: #{tpu_custom_call.1} parent=11 // pred_check
          %p319 = pneg %p197
        $region38: #{tpu_custom_call.1} parent=11 // pred_check_branch
          %321 = sbr.rel (%p319) target = $region40
        $region39: #{tpu_custom_call.1} parent=11 // pred_region
          %323 = vsyncadd [#allocation12], 0
          %s324 = sshll.u32 %s7, 4
          %s325 = int_to_ptr.hbm [resolvable:$true] %s324
          %s326 = sshll.u32 [#allocation11], 4
          %s327 = int_to_ptr.vmem [resolvable:$true] %s326
          %332 = dma.hbm_to_vmem [thread:$0]  %s325, 6144, %s327, [#allocation12], 128, 128, 8
        $region40: #{tpu_custom_call.1} parent=11 // pred_fallthru
          _
        // Predicated region
        $region41: #{tpu_custom_call.1} parent=11 // pred_check
          %p333 = pneg %p218
        $region42: #{tpu_custom_call.1} parent=11 // pred_check_branch
          %335 = sbr.rel (%p333) target = $region44
        $region43: #{tpu_custom_call.1} parent=11 // pred_region
          _
        $region44: #{tpu_custom_call.1} parent=11 // pred_fallthru
          _
      $region12: #{tpu_custom_call.1} parent=5 // pred_fallthru
        _
      %p336 = scmp.lt.s32.totalorder %s24, 2
      // Predicated region
      $region45: #{tpu_custom_call.1} parent=5 // pred_check
        %p337 = pneg %p336
      $region46: #{tpu_custom_call.1} parent=5 // pred_check_branch
        %339 = sbr.rel (%p337) target = $region48
      $region47: #{tpu_custom_call.1} parent=5 // pred_region
        // Predicated region
        $region49: #{tpu_custom_call.1} parent=47 // pred_check
          %p340 = pneg %p44
        $region50: #{tpu_custom_call.1} parent=47 // pred_check_branch
          %342 = sbr.rel (%p340) target = $region52
        $region51: #{tpu_custom_call.1} parent=47 // pred_region
          %s343 = sand.u32 %s34, 1
          %s344 = scalar_lea.sflag [#allocation3], %s343
          %s345 = sand.u32 %s34, 1
          %s346 = smul.addr %s345, 32
          %s347 = scalar_lea.vmem [#allocation2], %s346
          %s348 = smul.u32 4, %s24
          %350 = vsyncadd %s344, 0
          %s351 = smul.addr %s348, 8
          %s352 = scalar_lea.hbm %s0, %s351
          %s353 = sshll.u32 %s352, 4
          %s354 = int_to_ptr.hbm [resolvable:$true] %s353
          %s355 = sshll.u32 %s347, 4
          %s356 = int_to_ptr.vmem [resolvable:$true] %s355
          %361 = dma.hbm_to_vmem [thread:$0]  %s354, 512, %s356, %s344, 128, 128, 8
        $region52: #{tpu_custom_call.1} parent=47 // pred_fallthru
          _
      $region48: #{tpu_custom_call.1} parent=5 // pred_fallthru
        _
      %p362 = scmp.le.s32.totalorder 1, %s24
      %p363 = scmp.lt.s32.totalorder %s24, 3
      %p364 = pnand %p362, %p363
      %p365 = pneg %p364
      // Predicated region
      $region53: #{tpu_custom_call.1} parent=5 // pred_check
        _
      $region54: #{tpu_custom_call.1} parent=5 // pred_check_branch
        %367 = sbr.rel (%p364) target = $region56
      $region55: #{tpu_custom_call.1} parent=5 // pred_region
        %s368 = ssub.s32 %s24, 1
        %s369 = sand.u32 %s37, 1
        %s370 = scalar_lea.sflag [#allocation3], %s369
        %s371 = sand.u32 %s37, 1
        %s372 = smul.addr %s371, 32
        %s373 = scalar_lea.vmem [#allocation2], %s372
        // Predicated region
        $region57: #{tpu_custom_call.1} parent=55 // pred_check
          %p374 = pneg %p50
        $region58: #{tpu_custom_call.1} parent=55 // pred_check_branch
          %376 = sbr.rel (%p374) target = $region60
        $region59: #{tpu_custom_call.1} parent=55 // pred_region
          %378 = dma.done %s370, 512
        $region60: #{tpu_custom_call.1} parent=55 // pred_fallthru
          _
        // Predicated region
        $region61: #{tpu_custom_call.1} parent=55 // pred_check
          %p379 = pneg %p71
        $region62: #{tpu_custom_call.1} parent=55 // pred_check_branch
          %381 = sbr.rel (%p379) target = $region64
        $region63: #{tpu_custom_call.1} parent=55 // pred_region
          %383 = dma.done [#allocation6], 2048
        $region64: #{tpu_custom_call.1} parent=55 // pred_fallthru
          _
        // Predicated region
        $region65: #{tpu_custom_call.1} parent=55 // pred_check
          %p384 = pneg %p92
        $region66: #{tpu_custom_call.1} parent=55 // pred_check_branch
          %386 = sbr.rel (%p384) target = $region68
        $region67: #{tpu_custom_call.1} parent=55 // pred_region
          %388 = dma.done [#allocation6], 16
        $region68: #{tpu_custom_call.1} parent=55 // pred_fallthru
          _
        // Predicated region
        $region69: #{tpu_custom_call.1} parent=55 // pred_check
          %p389 = pneg %p113
        $region70: #{tpu_custom_call.1} parent=55 // pred_check_branch
          %391 = sbr.rel (%p389) target = $region72
        $region71: #{tpu_custom_call.1} parent=55 // pred_region
          %393 = dma.done [#allocation9], 4096
        $region72: #{tpu_custom_call.1} parent=55 // pred_fallthru
          _
        // Predicated region
        $region73: #{tpu_custom_call.1} parent=55 // pred_check
          %p394 = pneg %p155
        $region74: #{tpu_custom_call.1} parent=55 // pred_check_branch
          %396 = sbr.rel (%p394) target = $region76
        $region75: #{tpu_custom_call.1} parent=55 // pred_region
          %398 = dma.done [#allocation9], 12288
        $region76: #{tpu_custom_call.1} parent=55 // pred_fallthru
          _
        // Predicated region
        $region77: #{tpu_custom_call.1} parent=55 // pred_check
          %p399 = pneg %p197
        $region78: #{tpu_custom_call.1} parent=55 // pred_check_branch
          %401 = sbr.rel (%p399) target = $region80
        $region79: #{tpu_custom_call.1} parent=55 // pred_region
          %403 = dma.done [#allocation12], 6144
        $region80: #{tpu_custom_call.1} parent=55 // pred_fallthru
          _
        %s404 = sand.u32 %s37, 1
        %s405 = scalar_lea.sflag [#allocation3], %s404
        %s406 = sand.u32 %s37, 1
        %s407 = smul.addr %s406, 32
        %s408 = scalar_lea.vmem [#allocation2], %s407
        %p409 = pneg %p50
        %p410 = pneg %p47
        %p411 = pneg %p71
        %p412 = pneg %p68
        %p413 = pneg %p92
        %p414 = pneg %p89
        %p415 = pneg %p113
        %p416 = pneg %p110
        %p417 = pneg %p134
        %p418 = pneg %p131
        %p419 = pneg %p155
        %p420 = pneg %p152
        %p421 = pneg %p176
        %p422 = pneg %p173
        %p423 = pneg %p197
        %p424 = pneg %p194
        %p425 = pneg %p218
        %p426 = pneg %p215
        %p427 = pneg %p244
        %p428 = pneg %p241
        %s429 = sand.u32 %s231, 1
        %s430 = scalar_lea.sflag [#allocation4], %s429
        %s431 = sand.u32 %s231, 1
        %s432 = smul.addr %s431, 32
        %s433 = scalar_lea.vmem [#allocation13], %s432
        %s434 = smul.u32 4, %s29
        %s435 = smul.u32 4, %s29
        %v436 = vld [vmem:[%s373] sm:$0xff]
        %v437 = vld [vmem:[%s373 + $0x8] sm:$0xff]
        %v438 = vld [vmem:[%s373 + $0x10] sm:$0xff]
        %v439 = vld [vmem:[%s373 + $0x18] sm:$0xff]
        %v440 = vld [vmem:[#allocation5] sm:$0xff]
        %v441 = vld [vmem:[#allocation5 + $0x8] sm:$0xff]
        %v442 = vld [vmem:[#allocation5 + $0x10] sm:$0xff]
        %v443 = vld [vmem:[#allocation5 + $0x18] sm:$0xff]
        %v444 = vld [vmem:[#allocation5 + $0x20] sm:$0xff]
        %v445 = vld [vmem:[#allocation5 + $0x28] sm:$0xff]
        %v446 = vld [vmem:[#allocation5 + $0x30] sm:$0xff]
        %v447 = vld [vmem:[#allocation5 + $0x38] sm:$0xff]
        %v448 = vld [vmem:[#allocation5 + $0x40] sm:$0xff]
        %v449 = vld [vmem:[#allocation5 + $0x48] sm:$0xff]
        %v450 = vld [vmem:[#allocation5 + $0x50] sm:$0xff]
        %v451 = vld [vmem:[#allocation5 + $0x58] sm:$0xff]
        %v452 = vld [vmem:[#allocation5 + $0x60] sm:$0xff]
        %v453 = vld [vmem:[#allocation5 + $0x68] sm:$0xff]
        %v454 = vld [vmem:[#allocation5 + $0x70] sm:$0xff]
        %v455 = vld [vmem:[#allocation5 + $0x78] sm:$0xff]
        %v456 = vld [vmem:[#allocation7] sm:$0x1]
        %v458 = vperm.slane %v456, 0
        %460 = vmatpush.msra.mxu0 %v455
        %461 = vmatpush.msra.mxu0 %v454
        %462 = vmatpush.msra.mxu0 %v453
        %463 = vmatpush.msra.mxu0 %v452
        %464 = vmatpush.msra.mxu0 %v451
        %465 = vmatpush.msra.mxu0 %v450
        %466 = vmatpush.msra.mxu0 %v449
        %467 = vmatpush.msra.mxu0 %v448
        %468 = vmatpush.msra.mxu0 %v447
        %469 = vmatpush.msra.mxu0 %v446
        %470 = vmatpush.msra.mxu0 %v445
        %471 = vmatpush.msra.mxu0 %v444
        %472 = vmatpush.msra.mxu0 %v443
        %473 = vmatpush.msra.mxu0 %v442
        %474 = vmatpush.msra.mxu0 %v441
        %475 = vmatpush.msra.mxu0 %v440
        %476 = vmatmul.f32.gmra.mxu0 %v436
        %v477 = vpop.f32.mrf.mxu0
        %v478 = vadd.f32 %v458, %v477
        %479 = vmatmul.f32.gmra.mxu0 %v437
        %v480 = vpop.f32.mrf.mxu0
        %v481 = vadd.f32 %v458, %v480
        %482 = vmatmul.f32.gmra.mxu0 %v438
        %v483 = vpop.f32.mrf.mxu0
        %v484 = vadd.f32 %v458, %v483
        %485 = vmatmul.f32.gmra.mxu0 %v439
        %v486 = vpop.f32.mrf.mxu0
        %v487 = vadd.f32 %v458, %v486
        %488 = vdwg.mxu0
        %v489 = vmax.f32 %v478, 0.0
        %v490 = vmax.f32 %v481, 0.0
        %v491 = vmax.f32 %v484, 0.0
        %v492 = vmax.f32 %v487, 0.0
        %v493 = vld [vmem:[#allocation8] sm:$0xff]
        %v494 = vld [vmem:[#allocation8 + $0x8] sm:$0xff]
        %v495 = vld [vmem:[#allocation8 + $0x10] sm:$0xff]
        %v496 = vld [vmem:[#allocation8 + $0x18] sm:$0xff]
        %v497 = vld [vmem:[#allocation8 + $0x20] sm:$0xff]
        %v498 = vld [vmem:[#allocation8 + $0x28] sm:$0xff]
        %v499 = vld [vmem:[#allocation8 + $0x30] sm:$0xff]
        %v500 = vld [vmem:[#allocation8 + $0x38] sm:$0xff]
        %v501 = vld [vmem:[#allocation8 + $0x40] sm:$0xff]
        %v502 = vld [vmem:[#allocation8 + $0x48] sm:$0xff]
        %v503 = vld [vmem:[#allocation8 + $0x50] sm:$0xff]
        %v504 = vld [vmem:[#allocation8 + $0x58] sm:$0xff]
        %v505 = vld [vmem:[#allocation8 + $0x60] sm:$0xff]
        %v506 = vld [vmem:[#allocation8 + $0x68] sm:$0xff]
        %v507 = vld [vmem:[#allocation8 + $0x70] sm:$0xff]
        %v508 = vld [vmem:[#allocation8 + $0x78] sm:$0xff]
        %v509 = vld [vmem:[#allocation8 + $0x80] sm:$0xff]
        %v510 = vld [vmem:[#allocation8 + $0x88] sm:$0xff]
        %v511 = vld [vmem:[#allocation8 + $0x90] sm:$0xff]
        %v512 = vld [vmem:[#allocation8 + $0x98] sm:$0xff]
        %v513 = vld [vmem:[#allocation8 + $0xa0] sm:$0xff]
        %v514 = vld [vmem:[#allocation8 + $0xa8] sm:$0xff]
        %v515 = vld [vmem:[#allocation8 + $0xb0] sm:$0xff]
        %v516 = vld [vmem:[#allocation8 + $0xb8] sm:$0xff]
        %v517 = vld [vmem:[#allocation8 + $0xc0] sm:$0xff]
        %v518 = vld [vmem:[#allocation8 + $0xc8] sm:$0xff]
        %v519 = vld [vmem:[#allocation8 + $0xd0] sm:$0xff]
        %v520 = vld [vmem:[#allocation8 + $0xd8] sm:$0xff]
        %v521 = vld [vmem:[#allocation8 + $0xe0] sm:$0xff]
        %v522 = vld [vmem:[#allocation8 + $0xe8] sm:$0xff]
        %v523 = vld [vmem:[#allocation8 + $0xf0] sm:$0xff]
        %v524 = vld [vmem:[#allocation8 + $0xf8] sm:$0xff]
        %v525 = vld [vmem:[%s4] sm:$0x3]
        %v527 = vperm.slane %v525, 0
        %v528 = vperm.slane %v525, 1
        %531 = vmatpush.msra.mxu0 %v523
        %532 = vmatpush.msra.mxu0 %v521
        %533 = vmatpush.msra.mxu0 %v519
        %534 = vmatpush.msra.mxu0 %v517
        %535 = vmatpush.msra.mxu0 %v515
        %536 = vmatpush.msra.mxu0 %v513
        %537 = vmatpush.msra.mxu0 %v511
        %538 = vmatpush.msra.mxu0 %v509
        %539 = vmatpush.msra.mxu0 %v507
        %540 = vmatpush.msra.mxu0 %v505
        %541 = vmatpush.msra.mxu0 %v503
        %542 = vmatpush.msra.mxu0 %v501
        %543 = vmatpush.msra.mxu0 %v499
        %544 = vmatpush.msra.mxu0 %v497
        %545 = vmatpush.msra.mxu0 %v495
        %546 = vmatpush.msra.mxu0 %v493
        %547 = vmatmul.f32.gmra.mxu0 %v489
        %v548 = vpop.f32.mrf.mxu0
        %v549 = vadd.f32 %v527, %v548
        %550 = vmatmul.f32.gmra.mxu0 %v490
        %v551 = vpop.f32.mrf.mxu0
        %v552 = vadd.f32 %v527, %v551
        %553 = vmatmul.f32.gmra.mxu0 %v491
        %v554 = vpop.f32.mrf.mxu0
        %v555 = vadd.f32 %v527, %v554
        %556 = vmatmul.f32.gmra.mxu0 %v492
        %v557 = vpop.f32.mrf.mxu0
        %v558 = vadd.f32 %v527, %v557
        %559 = vdwg.mxu0
        %560 = vmatpush.msra.mxu0 %v524
        %561 = vmatpush.msra.mxu0 %v522
        %562 = vmatpush.msra.mxu0 %v520
        %563 = vmatpush.msra.mxu0 %v518
        %564 = vmatpush.msra.mxu0 %v516
        %565 = vmatpush.msra.mxu0 %v514
        %566 = vmatpush.msra.mxu0 %v512
        %567 = vmatpush.msra.mxu0 %v510
        %568 = vmatpush.msra.mxu0 %v508
        %569 = vmatpush.msra.mxu0 %v506
        %570 = vmatpush.msra.mxu0 %v504
        %571 = vmatpush.msra.mxu0 %v502
        %572 = vmatpush.msra.mxu0 %v500
        %573 = vmatpush.msra.mxu0 %v498
        %574 = vmatpush.msra.mxu0 %v496
        %575 = vmatpush.msra.mxu0 %v494
        %576 = vmatmul.f32.gmra.mxu0 %v489
        %v577 = vpop.f32.mrf.mxu0
        %v578 = vadd.f32 %v528, %v577
        %579 = vmatmul.f32.gmra.mxu0 %v490
        %v580 = vpop.f32.mrf.mxu0
        %v581 = vadd.f32 %v528, %v580
        %582 = vmatmul.f32.gmra.mxu0 %v491
        %v583 = vpop.f32.mrf.mxu0
        %v584 = vadd.f32 %v528, %v583
        %585 = vmatmul.f32.gmra.mxu0 %v492
        %v586 = vpop.f32.mrf.mxu0
        %v587 = vadd.f32 %v528, %v586
        %588 = vdwg.mxu0
        %v589 = vmax.f32 %v549, 0.0
        %v590 = vmax.f32 %v578, 0.0
        %v591 = vmax.f32 %v552, 0.0
        %v592 = vmax.f32 %v581, 0.0
        %v593 = vmax.f32 %v555, 0.0
        %v594 = vmax.f32 %v584, 0.0
        %v595 = vmax.f32 %v558, 0.0
        %v596 = vmax.f32 %v587, 0.0
        %v597 = vld [vmem:[#allocation10] sm:$0xff]
        %v598 = vld [vmem:[#allocation10 + $0x8] sm:$0xff]
        %v599 = vld [vmem:[#allocation10 + $0x10] sm:$0xff]
        %v600 = vld [vmem:[#allocation10 + $0x18] sm:$0xff]
        %v601 = vld [vmem:[#allocation10 + $0x20] sm:$0xff]
        %v602 = vld [vmem:[#allocation10 + $0x28] sm:$0xff]
        %v603 = vld [vmem:[#allocation10 + $0x30] sm:$0xff]
        %v604 = vld [vmem:[#allocation10 + $0x38] sm:$0xff]
        %v605 = vld [vmem:[#allocation10 + $0x40] sm:$0xff]
        %v606 = vld [vmem:[#allocation10 + $0x48] sm:$0xff]
        %v607 = vld [vmem:[#allocation10 + $0x50] sm:$0xff]
        %v608 = vld [vmem:[#allocation10 + $0x58] sm:$0xff]
        %v609 = vld [vmem:[#allocation10 + $0x60] sm:$0xff]
        %v610 = vld [vmem:[#allocation10 + $0x68] sm:$0xff]
        %v611 = vld [vmem:[#allocation10 + $0x70] sm:$0xff]
        %v612 = vld [vmem:[#allocation10 + $0x78] sm:$0xff]
        %v613 = vld [vmem:[#allocation10 + $0x80] sm:$0xff]
        %v614 = vld [vmem:[#allocation10 + $0x88] sm:$0xff]
        %v615 = vld [vmem:[#allocation10 + $0x90] sm:$0xff]
        %v616 = vld [vmem:[#allocation10 + $0x98] sm:$0xff]
        %v617 = vld [vmem:[#allocation10 + $0xa0] sm:$0xff]
        %v618 = vld [vmem:[#allocation10 + $0xa8] sm:$0xff]
        %v619 = vld [vmem:[#allocation10 + $0xb0] sm:$0xff]
        %v620 = vld [vmem:[#allocation10 + $0xb8] sm:$0xff]
        %v621 = vld [vmem:[#allocation10 + $0xc0] sm:$0xff]
        %v622 = vld [vmem:[#allocation10 + $0xc8] sm:$0xff]
        %v623 = vld [vmem:[#allocation10 + $0xd0] sm:$0xff]
        %v624 = vld [vmem:[#allocation10 + $0xd8] sm:$0xff]
        %v625 = vld [vmem:[#allocation10 + $0xe0] sm:$0xff]
        %v626 = vld [vmem:[#allocation10 + $0xe8] sm:$0xff]
        %v627 = vld [vmem:[#allocation10 + $0xf0] sm:$0xff]
        %v628 = vld [vmem:[#allocation10 + $0xf8] sm:$0xff]
        %v629 = vld [vmem:[#allocation10 + $0x100] sm:$0xff]
        %v630 = vld [vmem:[#allocation10 + $0x108] sm:$0xff]
        %v631 = vld [vmem:[#allocation10 + $0x110] sm:$0xff]
        %v632 = vld [vmem:[#allocation10 + $0x118] sm:$0xff]
        %v633 = vld [vmem:[#allocation10 + $0x120] sm:$0xff]
        %v634 = vld [vmem:[#allocation10 + $0x128] sm:$0xff]
        %v635 = vld [vmem:[#allocation10 + $0x130] sm:$0xff]
        %v636 = vld [vmem:[#allocation10 + $0x138] sm:$0xff]
        %v637 = vld [vmem:[#allocation10 + $0x140] sm:$0xff]
        %v638 = vld [vmem:[#allocation10 + $0x148] sm:$0xff]
        %v639 = vld [vmem:[#allocation10 + $0x150] sm:$0xff]
        %v640 = vld [vmem:[#allocation10 + $0x158] sm:$0xff]
        %v641 = vld [vmem:[#allocation10 + $0x160] sm:$0xff]
        %v642 = vld [vmem:[#allocation10 + $0x168] sm:$0xff]
        %v643 = vld [vmem:[#allocation10 + $0x170] sm:$0xff]
        %v644 = vld [vmem:[#allocation10 + $0x178] sm:$0xff]
        %v645 = vld [vmem:[#allocation10 + $0x180] sm:$0xff]
        %v646 = vld [vmem:[#allocation10 + $0x188] sm:$0xff]
        %v647 = vld [vmem:[#allocation10 + $0x190] sm:$0xff]
        %v648 = vld [vmem:[#allocation10 + $0x198] sm:$0xff]
        %v649 = vld [vmem:[#allocation10 + $0x1a0] sm:$0xff]
        %v650 = vld [vmem:[#allocation10 + $0x1a8] sm:$0xff]
        %v651 = vld [vmem:[#allocation10 + $0x1b0] sm:$0xff]
        %v652 = vld [vmem:[#allocation10 + $0x1b8] sm:$0xff]
        %v653 = vld [vmem:[#allocation10 + $0x1c0] sm:$0xff]
        %v654 = vld [vmem:[#allocation10 + $0x1c8] sm:$0xff]
        %v655 = vld [vmem:[#allocation10 + $0x1d0] sm:$0xff]
        %v656 = vld [vmem:[#allocation10 + $0x1d8] sm:$0xff]
        %v657 = vld [vmem:[#allocation10 + $0x1e0] sm:$0xff]
        %v658 = vld [vmem:[#allocation10 + $0x1e8] sm:$0xff]
        %v659 = vld [vmem:[#allocation10 + $0x1f0] sm:$0xff]
        %v660 = vld [vmem:[#allocation10 + $0x1f8] sm:$0xff]
        %v661 = vld [vmem:[#allocation10 + $0x200] sm:$0xff]
        %v662 = vld [vmem:[#allocation10 + $0x208] sm:$0xff]
        %v663 = vld [vmem:[#allocation10 + $0x210] sm:$0xff]
        %v664 = vld [vmem:[#allocation10 + $0x218] sm:$0xff]
        %v665 = vld [vmem:[#allocation10 + $0x220] sm:$0xff]
        %v666 = vld [vmem:[#allocation10 + $0x228] sm:$0xff]
        %v667 = vld [vmem:[#allocation10 + $0x230] sm:$0xff]
        %v668 = vld [vmem:[#allocation10 + $0x238] sm:$0xff]
        %v669 = vld [vmem:[#allocation10 + $0x240] sm:$0xff]
        %v670 = vld [vmem:[#allocation10 + $0x248] sm:$0xff]
        %v671 = vld [vmem:[#allocation10 + $0x250] sm:$0xff]
        %v672 = vld [vmem:[#allocation10 + $0x258] sm:$0xff]
        %v673 = vld [vmem:[#allocation10 + $0x260] sm:$0xff]
        %v674 = vld [vmem:[#allocation10 + $0x268] sm:$0xff]
        %v675 = vld [vmem:[#allocation10 + $0x270] sm:$0xff]
        %v676 = vld [vmem:[#allocation10 + $0x278] sm:$0xff]
        %v677 = vld [vmem:[#allocation10 + $0x280] sm:$0xff]
        %v678 = vld [vmem:[#allocation10 + $0x288] sm:$0xff]
        %v679 = vld [vmem:[#allocation10 + $0x290] sm:$0xff]
        %v680 = vld [vmem:[#allocation10 + $0x298] sm:$0xff]
        %v681 = vld [vmem:[#allocation10 + $0x2a0] sm:$0xff]
        %v682 = vld [vmem:[#allocation10 + $0x2a8] sm:$0xff]
        %v683 = vld [vmem:[#allocation10 + $0x2b0] sm:$0xff]
        %v684 = vld [vmem:[#allocation10 + $0x2b8] sm:$0xff]
        %v685 = vld [vmem:[#allocation10 + $0x2c0] sm:$0xff]
        %v686 = vld [vmem:[#allocation10 + $0x2c8] sm:$0xff]
        %v687 = vld [vmem:[#allocation10 + $0x2d0] sm:$0xff]
        %v688 = vld [vmem:[#allocation10 + $0x2d8] sm:$0xff]
        %v689 = vld [vmem:[#allocation10 + $0x2e0] sm:$0xff]
        %v690 = vld [vmem:[#allocation10 + $0x2e8] sm:$0xff]
        %v691 = vld [vmem:[#allocation10 + $0x2f0] sm:$0xff]
        %v692 = vld [vmem:[#allocation10 + $0x2f8] sm:$0xff]
        %v693 = vld [vmem:[%s6] sm:$0x7]
        %v695 = vperm.slane %v693, 0
        %v696 = vperm.slane %v693, 1
        %v697 = vperm.slane %v693, 2
        %701 = vmatpush.msra.mxu0 %v642
        %702 = vmatpush.msra.mxu0 %v639
        %703 = vmatpush.msra.mxu0 %v636
        %704 = vmatpush.msra.mxu0 %v633
        %705 = vmatpush.msra.mxu0 %v630
        %706 = vmatpush.msra.mxu0 %v627
        %707 = vmatpush.msra.mxu0 %v624
        %708 = vmatpush.msra.mxu0 %v621
        %709 = vmatpush.msra.mxu0 %v618
        %710 = vmatpush.msra.mxu0 %v615
        %711 = vmatpush.msra.mxu0 %v612
        %712 = vmatpush.msra.mxu0 %v609
        %713 = vmatpush.msra.mxu0 %v606
        %714 = vmatpush.msra.mxu0 %v603
        %715 = vmatpush.msra.mxu0 %v600
        %716 = vmatpush.msra.mxu0 %v597
        %717 = vmatmul.f32.gmra.mxu0 %v589
        %v718 = vpop.f32.mrf.mxu0
        %v719 = vadd.f32 %v695, %v718
        %720 = vmatmul.f32.gmra.mxu0 %v591
        %v721 = vpop.f32.mrf.mxu0
        %v722 = vadd.f32 %v695, %v721
        %723 = vmatmul.f32.gmra.mxu0 %v593
        %v724 = vpop.f32.mrf.mxu0
        %v725 = vadd.f32 %v695, %v724
        %726 = vmatmul.f32.gmra.mxu0 %v595
        %v727 = vpop.f32.mrf.mxu0
        %v728 = vadd.f32 %v695, %v727
        %729 = vdwg.mxu0
        %730 = vmatpush.msra.mxu0 %v690
        %731 = vmatpush.msra.mxu0 %v687
        %732 = vmatpush.msra.mxu0 %v684
        %733 = vmatpush.msra.mxu0 %v681
        %734 = vmatpush.msra.mxu0 %v678
        %735 = vmatpush.msra.mxu0 %v675
        %736 = vmatpush.msra.mxu0 %v672
        %737 = vmatpush.msra.mxu0 %v669
        %738 = vmatpush.msra.mxu0 %v666
        %739 = vmatpush.msra.mxu0 %v663
        %740 = vmatpush.msra.mxu0 %v660
        %741 = vmatpush.msra.mxu0 %v657
        %742 = vmatpush.msra.mxu0 %v654
        %743 = vmatpush.msra.mxu0 %v651
        %744 = vmatpush.msra.mxu0 %v648
        %745 = vmatpush.msra.mxu0 %v645
        %746 = vmatmul.f32.gmra.mxu0 %v590
        %v747 = vpop.f32.mrf.mxu0
        %v748 = vadd.f32 %v719, %v747
        %749 = vmatmul.f32.gmra.mxu0 %v592
        %v750 = vpop.f32.mrf.mxu0
        %v751 = vadd.f32 %v722, %v750
        %752 = vmatmul.f32.gmra.mxu0 %v594
        %v753 = vpop.f32.mrf.mxu0
        %v754 = vadd.f32 %v725, %v753
        %755 = vmatmul.f32.gmra.mxu0 %v596
        %v756 = vpop.f32.mrf.mxu0
        %v757 = vadd.f32 %v728, %v756
        %758 = vdwg.mxu0
        %759 = vmatpush.msra.mxu0 %v643
        %760 = vmatpush.msra.mxu0 %v640
        %761 = vmatpush.msra.mxu0 %v637
        %762 = vmatpush.msra.mxu0 %v634
        %763 = vmatpush.msra.mxu0 %v631
        %764 = vmatpush.msra.mxu0 %v628
        %765 = vmatpush.msra.mxu0 %v625
        %766 = vmatpush.msra.mxu0 %v622
        %767 = vmatpush.msra.mxu0 %v619
        %768 = vmatpush.msra.mxu0 %v616
        %769 = vmatpush.msra.mxu0 %v613
        %770 = vmatpush.msra.mxu0 %v610
        %771 = vmatpush.msra.mxu0 %v607
        %772 = vmatpush.msra.mxu0 %v604
        %773 = vmatpush.msra.mxu0 %v601
        %774 = vmatpush.msra.mxu0 %v598
        %775 = vmatmul.f32.gmra.mxu0 %v589
        %v776 = vpop.f32.mrf.mxu0
        %v777 = vadd.f32 %v696, %v776
        %778 = vmatmul.f32.gmra.mxu0 %v591
        %v779 = vpop.f32.mrf.mxu0
        %v780 = vadd.f32 %v696, %v779
        %781 = vmatmul.f32.gmra.mxu0 %v593
        %v782 = vpop.f32.mrf.mxu0
        %v783 = vadd.f32 %v696, %v782
        %784 = vmatmul.f32.gmra.mxu0 %v595
        %v785 = vpop.f32.mrf.mxu0
        %v786 = vadd.f32 %v696, %v785
        %787 = vdwg.mxu0
        %788 = vmatpush.msra.mxu0 %v691
        %789 = vmatpush.msra.mxu0 %v688
        %790 = vmatpush.msra.mxu0 %v685
        %791 = vmatpush.msra.mxu0 %v682
        %792 = vmatpush.msra.mxu0 %v679
        %793 = vmatpush.msra.mxu0 %v676
        %794 = vmatpush.msra.mxu0 %v673
        %795 = vmatpush.msra.mxu0 %v670
        %796 = vmatpush.msra.mxu0 %v667
        %797 = vmatpush.msra.mxu0 %v664
        %798 = vmatpush.msra.mxu0 %v661
        %799 = vmatpush.msra.mxu0 %v658
        %800 = vmatpush.msra.mxu0 %v655
        %801 = vmatpush.msra.mxu0 %v652
        %802 = vmatpush.msra.mxu0 %v649
        %803 = vmatpush.msra.mxu0 %v646
        %804 = vmatmul.f32.gmra.mxu0 %v590
        %v805 = vpop.f32.mrf.mxu0
        %v806 = vadd.f32 %v777, %v805
        %807 = vmatmul.f32.gmra.mxu0 %v592
        %v808 = vpop.f32.mrf.mxu0
        %v809 = vadd.f32 %v780, %v808
        %810 = vmatmul.f32.gmra.mxu0 %v594
        %v811 = vpop.f32.mrf.mxu0
        %v812 = vadd.f32 %v783, %v811
        %813 = vmatmul.f32.gmra.mxu0 %v596
        %v814 = vpop.f32.mrf.mxu0
        %v815 = vadd.f32 %v786, %v814
        %816 = vdwg.mxu0
        %817 = vmatpush.msra.mxu0 %v644
        %818 = vmatpush.msra.mxu0 %v641
        %819 = vmatpush.msra.mxu0 %v638
        %820 = vmatpush.msra.mxu0 %v635
        %821 = vmatpush.msra.mxu0 %v632
        %822 = vmatpush.msra.mxu0 %v629
        %823 = vmatpush.msra.mxu0 %v626
        %824 = vmatpush.msra.mxu0 %v623
        %825 = vmatpush.msra.mxu0 %v620
        %826 = vmatpush.msra.mxu0 %v617
        %827 = vmatpush.msra.mxu0 %v614
        %828 = vmatpush.msra.mxu0 %v611
        %829 = vmatpush.msra.mxu0 %v608
        %830 = vmatpush.msra.mxu0 %v605
        %831 = vmatpush.msra.mxu0 %v602
        %832 = vmatpush.msra.mxu0 %v599
        %833 = vmatmul.f32.gmra.mxu0 %v589
        %v834 = vpop.f32.mrf.mxu0
        %v835 = vadd.f32 %v697, %v834
        %836 = vmatmul.f32.gmra.mxu0 %v591
        %v837 = vpop.f32.mrf.mxu0
        %v838 = vadd.f32 %v697, %v837
        %839 = vmatmul.f32.gmra.mxu0 %v593
        %v840 = vpop.f32.mrf.mxu0
        %v841 = vadd.f32 %v697, %v840
        %842 = vmatmul.f32.gmra.mxu0 %v595
        %v843 = vpop.f32.mrf.mxu0
        %v844 = vadd.f32 %v697, %v843
        %845 = vdwg.mxu0
        %846 = vmatpush.msra.mxu0 %v692
        %847 = vmatpush.msra.mxu0 %v689
        %848 = vmatpush.msra.mxu0 %v686
        %849 = vmatpush.msra.mxu0 %v683
        %850 = vmatpush.msra.mxu0 %v680
        %851 = vmatpush.msra.mxu0 %v677
        %852 = vmatpush.msra.mxu0 %v674
        %853 = vmatpush.msra.mxu0 %v671
        %854 = vmatpush.msra.mxu0 %v668
        %855 = vmatpush.msra.mxu0 %v665
        %856 = vmatpush.msra.mxu0 %v662
        %857 = vmatpush.msra.mxu0 %v659
        %858 = vmatpush.msra.mxu0 %v656
        %859 = vmatpush.msra.mxu0 %v653
        %860 = vmatpush.msra.mxu0 %v650
        %861 = vmatpush.msra.mxu0 %v647
        %862 = vmatmul.f32.gmra.mxu0 %v590
        %v863 = vpop.f32.mrf.mxu0
        %v864 = vadd.f32 %v835, %v863
        %865 = vmatmul.f32.gmra.mxu0 %v592
        %v866 = vpop.f32.mrf.mxu0
        %v867 = vadd.f32 %v838, %v866
        %868 = vmatmul.f32.gmra.mxu0 %v594
        %v869 = vpop.f32.mrf.mxu0
        %v870 = vadd.f32 %v841, %v869
        %871 = vmatmul.f32.gmra.mxu0 %v596
        %v872 = vpop.f32.mrf.mxu0
        %v873 = vadd.f32 %v844, %v872
        %874 = vdwg.mxu0
        %v875 = vmax.f32 %v748, 0.0
        %v876 = vmax.f32 %v806, 0.0
        %v877 = vmax.f32 %v864, 0.0
        %v878 = vmax.f32 %v751, 0.0
        %v879 = vmax.f32 %v809, 0.0
        %v880 = vmax.f32 %v867, 0.0
        %v881 = vmax.f32 %v754, 0.0
        %v882 = vmax.f32 %v812, 0.0
        %v883 = vmax.f32 %v870, 0.0
        %v884 = vmax.f32 %v757, 0.0
        %v885 = vmax.f32 %v815, 0.0
        %v886 = vmax.f32 %v873, 0.0
        %v887 = vld [vmem:[#allocation11] sm:$0xff]
        %v888 = vld [vmem:[#allocation11 + $0x8] sm:$0xff]
        %v889 = vld [vmem:[#allocation11 + $0x10] sm:$0xff]
        %v890 = vld [vmem:[#allocation11 + $0x18] sm:$0xff]
        %v891 = vld [vmem:[#allocation11 + $0x20] sm:$0xff]
        %v892 = vld [vmem:[#allocation11 + $0x28] sm:$0xff]
        %v893 = vld [vmem:[#allocation11 + $0x30] sm:$0xff]
        %v894 = vld [vmem:[#allocation11 + $0x38] sm:$0xff]
        %v895 = vld [vmem:[#allocation11 + $0x40] sm:$0xff]
        %v896 = vld [vmem:[#allocation11 + $0x48] sm:$0xff]
        %v897 = vld [vmem:[#allocation11 + $0x50] sm:$0xff]
        %v898 = vld [vmem:[#allocation11 + $0x58] sm:$0xff]
        %v899 = vld [vmem:[#allocation11 + $0x60] sm:$0xff]
        %v900 = vld [vmem:[#allocation11 + $0x68] sm:$0xff]
        %v901 = vld [vmem:[#allocation11 + $0x70] sm:$0xff]
        %v902 = vld [vmem:[#allocation11 + $0x78] sm:$0xff]
        %v903 = vld [vmem:[#allocation11 + $0x80] sm:$0xff]
        %v904 = vld [vmem:[#allocation11 + $0x88] sm:$0xff]
        %v905 = vld [vmem:[#allocation11 + $0x90] sm:$0xff]
        %v906 = vld [vmem:[#allocation11 + $0x98] sm:$0xff]
        %v907 = vld [vmem:[#allocation11 + $0xa0] sm:$0xff]
        %v908 = vld [vmem:[#allocation11 + $0xa8] sm:$0xff]
        %v909 = vld [vmem:[#allocation11 + $0xb0] sm:$0xff]
        %v910 = vld [vmem:[#allocation11 + $0xb8] sm:$0xff]
        %v911 = vld [vmem:[#allocation11 + $0xc0] sm:$0xff]
        %v912 = vld [vmem:[#allocation11 + $0xc8] sm:$0xff]
        %v913 = vld [vmem:[#allocation11 + $0xd0] sm:$0xff]
        %v914 = vld [vmem:[#allocation11 + $0xd8] sm:$0xff]
        %v915 = vld [vmem:[#allocation11 + $0xe0] sm:$0xff]
        %v916 = vld [vmem:[#allocation11 + $0xe8] sm:$0xff]
        %v917 = vld [vmem:[#allocation11 + $0xf0] sm:$0xff]
        %v918 = vld [vmem:[#allocation11 + $0xf8] sm:$0xff]
        %v919 = vld [vmem:[#allocation11 + $0x100] sm:$0xff]
        %v920 = vld [vmem:[#allocation11 + $0x108] sm:$0xff]
        %v921 = vld [vmem:[#allocation11 + $0x110] sm:$0xff]
        %v922 = vld [vmem:[#allocation11 + $0x118] sm:$0xff]
        %v923 = vld [vmem:[#allocation11 + $0x120] sm:$0xff]
        %v924 = vld [vmem:[#allocation11 + $0x128] sm:$0xff]
        %v925 = vld [vmem:[#allocation11 + $0x130] sm:$0xff]
        %v926 = vld [vmem:[#allocation11 + $0x138] sm:$0xff]
        %v927 = vld [vmem:[#allocation11 + $0x140] sm:$0xff]
        %v928 = vld [vmem:[#allocation11 + $0x148] sm:$0xff]
        %v929 = vld [vmem:[#allocation11 + $0x150] sm:$0xff]
        %v930 = vld [vmem:[#allocation11 + $0x158] sm:$0xff]
        %v931 = vld [vmem:[#allocation11 + $0x160] sm:$0xff]
        %v932 = vld [vmem:[#allocation11 + $0x168] sm:$0xff]
        %v933 = vld [vmem:[#allocation11 + $0x170] sm:$0xff]
        %v934 = vld [vmem:[#allocation11 + $0x178] sm:$0xff]
        %v935 = vld [vmem:[%s8] sm:$0x1]
        %v937 = vperm.slane %v935, 0
        %939 = vmatpush.msra.mxu0 %v902
        %940 = vmatpush.msra.mxu0 %v901
        %941 = vmatpush.msra.mxu0 %v900
        %942 = vmatpush.msra.mxu0 %v899
        %943 = vmatpush.msra.mxu0 %v898
        %944 = vmatpush.msra.mxu0 %v897
        %945 = vmatpush.msra.mxu0 %v896
        %946 = vmatpush.msra.mxu0 %v895
        %947 = vmatpush.msra.mxu0 %v894
        %948 = vmatpush.msra.mxu0 %v893
        %949 = vmatpush.msra.mxu0 %v892
        %950 = vmatpush.msra.mxu0 %v891
        %951 = vmatpush.msra.mxu0 %v890
        %952 = vmatpush.msra.mxu0 %v889
        %953 = vmatpush.msra.mxu0 %v888
        %954 = vmatpush.msra.mxu0 %v887
        %955 = vmatmul.f32.gmra.mxu0 %v875
        %v956 = vpop.f32.mrf.mxu0
        %v957 = vadd.f32 %v937, %v956
        %958 = vmatmul.f32.gmra.mxu0 %v878
        %v959 = vpop.f32.mrf.mxu0
        %v960 = vadd.f32 %v937, %v959
        %961 = vmatmul.f32.gmra.mxu0 %v881
        %v962 = vpop.f32.mrf.mxu0
        %v963 = vadd.f32 %v937, %v962
        %964 = vmatmul.f32.gmra.mxu0 %v884
        %v965 = vpop.f32.mrf.mxu0
        %v966 = vadd.f32 %v937, %v965
        %967 = vdwg.mxu0
        %968 = vmatpush.msra.mxu0 %v918
        %969 = vmatpush.msra.mxu0 %v917
        %970 = vmatpush.msra.mxu0 %v916
        %971 = vmatpush.msra.mxu0 %v915
        %972 = vmatpush.msra.mxu0 %v914
        %973 = vmatpush.msra.mxu0 %v913
        %974 = vmatpush.msra.mxu0 %v912
        %975 = vmatpush.msra.mxu0 %v911
        %976 = vmatpush.msra.mxu0 %v910
        %977 = vmatpush.msra.mxu0 %v909
        %978 = vmatpush.msra.mxu0 %v908
        %979 = vmatpush.msra.mxu0 %v907
        %980 = vmatpush.msra.mxu0 %v906
        %981 = vmatpush.msra.mxu0 %v905
        %982 = vmatpush.msra.mxu0 %v904
        %983 = vmatpush.msra.mxu0 %v903
        %984 = vmatmul.f32.gmra.mxu0 %v876
        %v985 = vpop.f32.mrf.mxu0
        %v986 = vadd.f32 %v957, %v985
        %987 = vmatmul.f32.gmra.mxu0 %v879
        %v988 = vpop.f32.mrf.mxu0
        %v989 = vadd.f32 %v960, %v988
        %990 = vmatmul.f32.gmra.mxu0 %v882
        %v991 = vpop.f32.mrf.mxu0
        %v992 = vadd.f32 %v963, %v991
        %993 = vmatmul.f32.gmra.mxu0 %v885
        %v994 = vpop.f32.mrf.mxu0
        %v995 = vadd.f32 %v966, %v994
        %996 = vdwg.mxu0
        %997 = vmatpush.msra.mxu0 %v934
        %998 = vmatpush.msra.mxu0 %v933
        %999 = vmatpush.msra.mxu0 %v932
        %1000 = vmatpush.msra.mxu0 %v931
        %1001 = vmatpush.msra.mxu0 %v930
        %1002 = vmatpush.msra.mxu0 %v929
        %1003 = vmatpush.msra.mxu0 %v928
        %1004 = vmatpush.msra.mxu0 %v927
        %1005 = vmatpush.msra.mxu0 %v926
        %1006 = vmatpush.msra.mxu0 %v925
        %1007 = vmatpush.msra.mxu0 %v924
        %1008 = vmatpush.msra.mxu0 %v923
        %1009 = vmatpush.msra.mxu0 %v922
        %1010 = vmatpush.msra.mxu0 %v921
        %1011 = vmatpush.msra.mxu0 %v920
        %1012 = vmatpush.msra.mxu0 %v919
        %1013 = vmatmul.f32.gmra.mxu0 %v877
        %v1014 = vpop.f32.mrf.mxu0
        %v1015 = vadd.f32 %v986, %v1014
        %1016 = vmatmul.f32.gmra.mxu0 %v880
        %v1017 = vpop.f32.mrf.mxu0
        %v1018 = vadd.f32 %v989, %v1017
        %1019 = vmatmul.f32.gmra.mxu0 %v883
        %v1020 = vpop.f32.mrf.mxu0
        %v1021 = vadd.f32 %v992, %v1020
        %1022 = vmatmul.f32.gmra.mxu0 %v886
        %v1023 = vpop.f32.mrf.mxu0
        %v1024 = vadd.f32 %v995, %v1023
        %1025 = vdwg.mxu0
        %1026 = vst [vmem:[%s433] sm:$0xff] %v1015
        %1027 = vst [vmem:[%s433 + $0x8] sm:$0xff] %v1018
        %1028 = vst [vmem:[%s433 + $0x10] sm:$0xff] %v1021
        %1029 = vst [vmem:[%s433 + $0x18] sm:$0xff] %v1024
        %s1030 = sand.u32 %s231, 1
        %s1031 = scalar_lea.sflag [#allocation4], %s1030
        %s1032 = sand.u32 %s231, 1
        %s1033 = smul.addr %s1032, 32
        %s1034 = scalar_lea.vmem [#allocation13], %s1033
        // Predicated region
        $region81: #{tpu_custom_call.1} parent=55 // pred_check
          %p1035 = pneg %p241
        $region82: #{tpu_custom_call.1} parent=55 // pred_check_branch
          %1037 = sbr.rel (%p1035) target = $region84
        $region83: #{tpu_custom_call.1} parent=55 // pred_region
          %s1038 = smul.u32 4, %s29
          %1040 = vsyncadd %s1031, 0
          %s1041 = smul.addr %s1038, 8
          %s1042 = scalar_lea.hbm %s9, %s1041
          %s1043 = sshll.u32 %s1034, 4
          %s1044 = int_to_ptr.vmem [resolvable:$true] %s1043
          %s1045 = sshll.u32 %s1042, 4
          %s1046 = int_to_ptr.hbm [resolvable:$true] %s1045
          %1051 = dma.vmem_to_hbm [thread:$0]  %s1044, 512, %s1046, %s1031, 128, 128, 8
        $region84: #{tpu_custom_call.1} parent=55 // pred_fallthru
          _
      $region56: #{tpu_custom_call.1} parent=5 // pred_fallthru
        _
      %p1052 = scmp.le.s32.totalorder 2, %s24
      // Predicated region
      $region85: #{tpu_custom_call.1} parent=5 // pred_check
        %p1053 = pneg %p1052
      $region86: #{tpu_custom_call.1} parent=5 // pred_check_branch
        %1055 = sbr.rel (%p1053) target = $region88
      $region87: #{tpu_custom_call.1} parent=5 // pred_region
        %s1056 = ssub.s32 %s24, 2
        // Predicated region
        $region89: #{tpu_custom_call.1} parent=87 // pred_check
          %p1057 = pneg %p247
        $region90: #{tpu_custom_call.1} parent=87 // pred_check_branch
          %1059 = sbr.rel (%p1057) target = $region92
        $region91: #{tpu_custom_call.1} parent=87 // pred_region
          %s1060 = sand.u32 %s232, 1
          %s1061 = scalar_lea.sflag [#allocation4], %s1060
          %s1062 = sand.u32 %s232, 1
          %s1063 = smul.addr %s1062, 32
          %s1064 = scalar_lea.vmem [#allocation13], %s1063
          %1066 = dma.done %s1061, 512
        $region92: #{tpu_custom_call.1} parent=87 // pred_fallthru
          _
      $region88: #{tpu_custom_call.1} parent=5 // pred_fallthru
        _
    $region6: #{tpu_custom_call.1} parent=1 // loop_footer
      %s28 = sadd.s32 1, %s24
    $region7: #{tpu_custom_call.1} parent=1 // loop_footer_branch
      %23 = sbr.rel target = $region3
    $region8: #{tpu_custom_call.1} parent=1 // loop_exit
      _
    %1067 = vsyncpa [#allocation3], 1
    %s1068 = scalar_lea.sflag [#allocation3], 1
    %1069 = vsyncpa %s1068, 1
    %1070 = vsyncpa [#allocation6], 1
    %1071 = vsyncpa [#allocation9], 1
    %1072 = vsyncpa [#allocation12], 1
    %1073 = vsyncpa [#allocation4], 1
    %s1074 = scalar_lea.sflag [#allocation4], 1
    %1075 = vsyncpa %s1074, 1

</llo_original>
